<compile_context>
chip_gen: v7x
topology: tpu7x:2x2x1
jax: 0.10.0
libtpu: 0.0.40
codegen_flags: <defaults>
</compile_context>

<pallas_src>
import jax
import jax.numpy as jnp
from jax import lax
from jax.experimental import pallas as pl
from jax.experimental.pallas import tpu as pltpu

# Small, TPU-friendly sizes (module default hidden=1026 shrunk to 128 = lane width).
# TODO(synk): restoring hidden=1026 requires padding to a multiple of 128 (1024/1152)
#             with masking of pad columns in the gate activations.
INPUT_SIZE = 1
HIDDEN = 128
SEQ_LEN = 8


def lstm_kernel(x_ref, wih_ref, whh_ref, b_ref, wlin_ref, blin_ref, out_ref):
    """Full LSTM recurrence + final Linear, executed entirely in VMEM."""
    H = wlin_ref.shape[1]
    seq_len = x_ref.shape[0]

    # ---- Hoisted input projection: one (seq_len, input_size) x (input_size, 4H)
    # matmul + bias broadcast, done once for every timestep. -----------------
    gates_x = (
        jnp.dot(x_ref[...], wih_ref[...], preferred_element_type=jnp.float32)
        + b_ref[...]
    )                                                  # (seq_len, 4H) f32

    # Weight-stationary recurrent weight: loaded once, bf16 for the MXU datapath.
    whh = whh_ref[...]                                 # (H, 4H) bf16

    h = jnp.zeros((1, H), jnp.float32)
    c = jnp.zeros((1, H), jnp.float32)

    # ---- Fully unrolled recurrence (seq_len is small and static). ----------
    for t in range(seq_len):
        # Per-step critical path: h @ W_hh^T (bf16 operands, f32 accumulate)
        # plus the activations; input contribution is a static row slice.
        gates = gates_x[t:t + 1, :] + jnp.dot(
            h.astype(jnp.bfloat16), whh, preferred_element_type=jnp.float32
        )                                              # (1, 4H) f32

        if_g = jax.nn.sigmoid(gates[:, 0:2 * H])       # fused sigmoid over [i|f]
        g_g = jnp.tanh(gates[:, 2 * H:3 * H])
        o_g = jax.nn.sigmoid(gates[:, 3 * H:4 * H])

        i_g = if_g[:, 0:H]
        f_g = if_g[:, H:2 * H]
        c = f_g * c + i_g * g_g
        h = o_g * jnp.tanh(c)

    # ---- Linear(H, 1) on the last hidden state: VPU multiply + lane reduce
    # (avoids an N=1 MXU push/drain). predictions[-1] semantics. -------------
    out_ref[...] = (
        jnp.sum(h * wlin_ref[...], axis=-1, keepdims=True) + blin_ref[...]
    )


def lstm_forward(input_seq, params):
    """input_seq: (seq_len,) or (seq_len, input_size). Returns shape (1,) like predictions[-1]."""
    x = input_seq.reshape(input_seq.shape[0], -1).astype(jnp.float32)

    w_ih, w_hh, b_ih, b_hh, w_lin, b_lin = params
    wih_t = w_ih.T.astype(jnp.float32)                 # (input_size, 4H)
    whh_t = w_hh.T.astype(jnp.bfloat16)                # (H, 4H)  bf16, weight-stationary
    bias = (b_ih + b_hh).reshape(1, -1).astype(jnp.float32)   # (1, 4H)
    wlin_row = w_lin.reshape(1, -1).astype(jnp.float32)        # (1, H)
    blin = b_lin.reshape(1, 1).astype(jnp.float32)             # (1, 1)

    vmem = pl.BlockSpec(memory_space=pltpu.MemorySpace.VMEM)
    out = pl.pallas_call(
        lstm_kernel,
        out_shape=jax.ShapeDtypeStruct((1, 1), jnp.float32),
        in_specs=[vmem] * 6,
        out_specs=vmem,
    )(x, wih_t, whh_t, bias, wlin_row, blin)
    return out.reshape(1)                              # matches predictions[-1] shape (1,)


def lstm_reference(input_seq, params):
    """Pure-JAX f32 reference mirroring torch.nn.LSTM + Linear semantics."""
    x = input_seq.reshape(input_seq.shape[0], -1).astype(jnp.float32)
    w_ih, w_hh, b_ih, b_hh, w_lin, b_lin = params
    H = w_hh.shape[1]

    def step(carry, x_t):
        h, c = carry
        gates = x_t @ w_ih.T + b_ih + h @ w_hh.T + b_hh
        i_g = jax.nn.sigmoid(gates[0:H])
        f_g = jax.nn.sigmoid(gates[H:2 * H])
        g_g = jnp.tanh(gates[2 * H:3 * H])
        o_g = jax.nn.sigmoid(gates[3 * H:4 * H])
        c_new = f_g * c + i_g * g_g
        h_new = o_g * jnp.tanh(c_new)
        return (h_new, c_new), h_new

    (h, c), hs = lax.scan(step, (jnp.zeros(H), jnp.zeros(H)), x)
    preds = hs @ w_lin.T + b_lin                       # (seq, 1)
    return preds[-1]


def init_params(key, input_size, hidden):
    """Deterministic init, PyTorch-style U(-1/sqrt(H), 1/sqrt(H))."""
    ks = jax.random.split(key, 6)
    bound = 1.0 / jnp.sqrt(hidden)
    u = lambda k, shape: jax.random.uniform(k, shape, jnp.float32, -bound, bound)
    w_ih = u(ks[0], (4 * hidden, input_size))
    w_hh = u(ks[1], (4 * hidden, hidden))
    b_ih = u(ks[2], (4 * hidden,))
    b_hh = u(ks[3], (4 * hidden,))
    w_lin = u(ks[4], (1, hidden))
    b_lin = u(ks[5], (1,))
    return (w_ih, w_hh, b_ih, b_hh, w_lin, b_lin)


if __name__ == "__main__":
    key = jax.random.PRNGKey(0)
    k_param, k_x = jax.random.split(key)
    params = init_params(k_param, INPUT_SIZE, HIDDEN)
    input_seq = jax.random.normal(k_x, (SEQ_LEN, INPUT_SIZE), jnp.float32)

    pred = jax.block_until_ready(lstm_forward(input_seq, params))
    ref = jax.block_until_ready(lstm_reference(input_seq, params))

    assert pred.shape == (1,), pred.shape
    # Kernel uses bf16 operands for the recurrent matmul (f32 accumulation), so
    # tolerance vs. the pure-f32 reference is relaxed accordingly.
    assert jnp.allclose(pred, ref, atol=1e-2, rtol=1e-2), (pred, ref)
    print("KERNEL_OK")
</pallas_src>

<mosaic_0001>
module attributes {stable_mosaic.version = 11 : i64} {
  func.func @lstm_kernel(%arg0: memref<8x1xf32, #tpu.memory_space<vmem>>, %arg1: memref<1x512xf32, #tpu.memory_space<vmem>>, %arg2: memref<128x512xbf16, #tpu.memory_space<vmem>>, %arg3: memref<1x512xf32, #tpu.memory_space<vmem>>, %arg4: memref<1x128xf32, #tpu.memory_space<vmem>>, %arg5: memref<1x1xf32, #tpu.memory_space<vmem>>, %arg6: memref<1x1xf32, #tpu.memory_space<vmem>>) attributes {dimension_semantics = [], scalar_prefetch = 0 : i64, scratch_operands = 0 : i64, tpu.core_type = #tpu.core_type<tc>} {
    %c0 = arith.constant 0 : index
    %c0_0 = arith.constant 0 : index
    %0 = vector.load %arg0[%c0, %c0_0] : memref<8x1xf32, #tpu.memory_space<vmem>>, vector<8x1xf32>
    %c0_1 = arith.constant 0 : index
    %c0_2 = arith.constant 0 : index
    %1 = vector.load %arg1[%c0_1, %c0_2] : memref<1x512xf32, #tpu.memory_space<vmem>>, vector<1x512xf32>
    %cst = arith.constant dense<0.000000e+00> : vector<8x512xf32>
    %2 = tpu.matmul %0, %1, %cst {dimension_numbers = #tpu.dot_dimension_numbers<[1], [0], [0], [1], [0, 0, 1, 1], [], []>} : vector<8x1xf32>, vector<1x512xf32>, vector<8x512xf32> -> vector<8x512xf32>
    %c0_3 = arith.constant 0 : index
    %c0_4 = arith.constant 0 : index
    %3 = vector.load %arg3[%c0_3, %c0_4] : memref<1x512xf32, #tpu.memory_space<vmem>>, vector<1x512xf32>
    %4 = vector.broadcast %3 : vector<1x512xf32> to vector<8x512xf32>
    %5 = arith.addf %2, %4 : vector<8x512xf32>
    %c0_5 = arith.constant 0 : index
    %c0_6 = arith.constant 0 : index
    %6 = vector.load %arg2[%c0_5, %c0_6] : memref<128x512xbf16, #tpu.memory_space<vmem>>, vector<128x512xbf16>
    %cst_7 = arith.constant 0.000000e+00 : f32
    %7 = vector.broadcast %cst_7 : f32 to vector<1x128xf32>
    %cst_8 = arith.constant 0.000000e+00 : f32
    %8 = vector.broadcast %cst_8 : f32 to vector<1x128xf32>
    %9 = vector.extract_strided_slice %5 {offsets = [0, 0], sizes = [1, 512], strides = [1, 1]} : vector<8x512xf32> to vector<1x512xf32>
    %10 = arith.truncf %7 : vector<1x128xf32> to vector<1x128xbf16>
    %cst_9 = arith.constant dense<0.000000e+00> : vector<1x512xf32>
    %11 = tpu.matmul %10, %6, %cst_9 {dimension_numbers = #tpu.dot_dimension_numbers<[1], [0], [0], [1], [0, 0, 1, 1], [], []>} : vector<1x128xbf16>, vector<128x512xbf16>, vector<1x512xf32> -> vector<1x512xf32>
    %12 = arith.addf %9, %11 : vector<1x512xf32>
    %13 = vector.extract_strided_slice %12 {offsets = [0, 0], sizes = [1, 256], strides = [1, 1]} : vector<1x512xf32> to vector<1x256xf32>
    %14 = arith.negf %13 : vector<1x256xf32>
    %15 = math.exp %14 : vector<1x256xf32>
    %cst_10 = arith.constant 1.000000e+00 : f32
    %16 = vector.broadcast %cst_10 : f32 to vector<1x256xf32>
    %17 = arith.addf %16, %15 : vector<1x256xf32>
    %18 = arith.divf %16, %17 : vector<1x256xf32>
    %19 = vector.extract_strided_slice %12 {offsets = [0, 256], sizes = [1, 128], strides = [1, 1]} : vector<1x512xf32> to vector<1x128xf32>
    %20 = math.tanh %19 : vector<1x128xf32>
    %21 = vector.extract_strided_slice %12 {offsets = [0, 384], sizes = [1, 128], strides = [1, 1]} : vector<1x512xf32> to vector<1x128xf32>
    %22 = arith.negf %21 : vector<1x128xf32>
    %23 = math.exp %22 : vector<1x128xf32>
    %cst_11 = arith.constant 1.000000e+00 : f32
    %24 = vector.broadcast %cst_11 : f32 to vector<1x128xf32>
    %25 = arith.addf %24, %23 : vector<1x128xf32>
    %26 = arith.divf %24, %25 : vector<1x128xf32>
    %27 = vector.extract_strided_slice %18 {offsets = [0, 0], sizes = [1, 128], strides = [1, 1]} : vector<1x256xf32> to vector<1x128xf32>
    %28 = vector.extract_strided_slice %18 {offsets = [0, 128], sizes = [1, 128], strides = [1, 1]} : vector<1x256xf32> to vector<1x128xf32>
    %29 = arith.mulf %28, %8 : vector<1x128xf32>
    %30 = arith.mulf %27, %20 : vector<1x128xf32>
    %31 = arith.addf %29, %30 : vector<1x128xf32>
    %32 = math.tanh %31 : vector<1x128xf32>
    %33 = arith.mulf %26, %32 : vector<1x128xf32>
    %34 = vector.extract_strided_slice %5 {offsets = [1, 0], sizes = [1, 512], strides = [1, 1]} : vector<8x512xf32> to vector<1x512xf32>
    %35 = arith.truncf %33 : vector<1x128xf32> to vector<1x128xbf16>
    %cst_12 = arith.constant dense<0.000000e+00> : vector<1x512xf32>
    %36 = tpu.matmul %35, %6, %cst_12 {dimension_numbers = #tpu.dot_dimension_numbers<[1], [0], [0], [1], [0, 0, 1, 1], [], []>} : vector<1x128xbf16>, vector<128x512xbf16>, vector<1x512xf32> -> vector<1x512xf32>
    %37 = arith.addf %34, %36 : vector<1x512xf32>
    %38 = vector.extract_strided_slice %37 {offsets = [0, 0], sizes = [1, 256], strides = [1, 1]} : vector<1x512xf32> to vector<1x256xf32>
    %39 = arith.negf %38 : vector<1x256xf32>
    %40 = math.exp %39 : vector<1x256xf32>
    %cst_13 = arith.constant 1.000000e+00 : f32
    %41 = vector.broadcast %cst_13 : f32 to vector<1x256xf32>
    %42 = arith.addf %41, %40 : vector<1x256xf32>
    %43 = arith.divf %41, %42 : vector<1x256xf32>
    %44 = vector.extract_strided_slice %37 {offsets = [0, 256], sizes = [1, 128], strides = [1, 1]} : vector<1x512xf32> to vector<1x128xf32>
    %45 = math.tanh %44 : vector<1x128xf32>
    %46 = vector.extract_strided_slice %37 {offsets = [0, 384], sizes = [1, 128], strides = [1, 1]} : vector<1x512xf32> to vector<1x128xf32>
    %47 = arith.negf %46 : vector<1x128xf32>
    %48 = math.exp %47 : vector<1x128xf32>
    %cst_14 = arith.constant 1.000000e+00 : f32
    %49 = vector.broadcast %cst_14 : f32 to vector<1x128xf32>
    %50 = arith.addf %49, %48 : vector<1x128xf32>
    %51 = arith.divf %49, %50 : vector<1x128xf32>
    %52 = vector.extract_strided_slice %43 {offsets = [0, 0], sizes = [1, 128], strides = [1, 1]} : vector<1x256xf32> to vector<1x128xf32>
    %53 = vector.extract_strided_slice %43 {offsets = [0, 128], sizes = [1, 128], strides = [1, 1]} : vector<1x256xf32> to vector<1x128xf32>
    %54 = arith.mulf %53, %31 : vector<1x128xf32>
    %55 = arith.mulf %52, %45 : vector<1x128xf32>
    %56 = arith.addf %54, %55 : vector<1x128xf32>
    %57 = math.tanh %56 : vector<1x128xf32>
    %58 = arith.mulf %51, %57 : vector<1x128xf32>
    %59 = vector.extract_strided_slice %5 {offsets = [2, 0], sizes = [1, 512], strides = [1, 1]} : vector<8x512xf32> to vector<1x512xf32>
    %60 = arith.truncf %58 : vector<1x128xf32> to vector<1x128xbf16>
    %cst_15 = arith.constant dense<0.000000e+00> : vector<1x512xf32>
    %61 = tpu.matmul %60, %6, %cst_15 {dimension_numbers = #tpu.dot_dimension_numbers<[1], [0], [0], [1], [0, 0, 1, 1], [], []>} : vector<1x128xbf16>, vector<128x512xbf16>, vector<1x512xf32> -> vector<1x512xf32>
    %62 = arith.addf %59, %61 : vector<1x512xf32>
    %63 = vector.extract_strided_slice %62 {offsets = [0, 0], sizes = [1, 256], strides = [1, 1]} : vector<1x512xf32> to vector<1x256xf32>
    %64 = arith.negf %63 : vector<1x256xf32>
    %65 = math.exp %64 : vector<1x256xf32>
    %cst_16 = arith.constant 1.000000e+00 : f32
    %66 = vector.broadcast %cst_16 : f32 to vector<1x256xf32>
    %67 = arith.addf %66, %65 : vector<1x256xf32>
    %68 = arith.divf %66, %67 : vector<1x256xf32>
    %69 = vector.extract_strided_slice %62 {offsets = [0, 256], sizes = [1, 128], strides = [1, 1]} : vector<1x512xf32> to vector<1x128xf32>
    %70 = math.tanh %69 : vector<1x128xf32>
    %71 = vector.extract_strided_slice %62 {offsets = [0, 384], sizes = [1, 128], strides = [1, 1]} : vector<1x512xf32> to vector<1x128xf32>
    %72 = arith.negf %71 : vector<1x128xf32>
    %73 = math.exp %72 : vector<1x128xf32>
    %cst_17 = arith.constant 1.000000e+00 : f32
    %74 = vector.broadcast %cst_17 : f32 to vector<1x128xf32>
    %75 = arith.addf %74, %73 : vector<1x128xf32>
    %76 = arith.divf %74, %75 : vector<1x128xf32>
    %77 = vector.extract_strided_slice %68 {offsets = [0, 0], sizes = [1, 128], strides = [1, 1]} : vector<1x256xf32> to vector<1x128xf32>
    %78 = vector.extract_strided_slice %68 {offsets = [0, 128], sizes = [1, 128], strides = [1, 1]} : vector<1x256xf32> to vector<1x128xf32>
    %79 = arith.mulf %78, %56 : vector<1x128xf32>
    %80 = arith.mulf %77, %70 : vector<1x128xf32>
    %81 = arith.addf %79, %80 : vector<1x128xf32>
    %82 = math.tanh %81 : vector<1x128xf32>
    %83 = arith.mulf %76, %82 : vector<1x128xf32>
    %84 = vector.extract_strided_slice %5 {offsets = [3, 0], sizes = [1, 512], strides = [1, 1]} : vector<8x512xf32> to vector<1x512xf32>
    %85 = arith.truncf %83 : vector<1x128xf32> to vector<1x128xbf16>
    %cst_18 = arith.constant dense<0.000000e+00> : vector<1x512xf32>
    %86 = tpu.matmul %85, %6, %cst_18 {dimension_numbers = #tpu.dot_dimension_numbers<[1], [0], [0], [1], [0, 0, 1, 1], [], []>} : vector<1x128xbf16>, vector<128x512xbf16>, vector<1x512xf32> -> vector<1x512xf32>
    %87 = arith.addf %84, %86 : vector<1x512xf32>
    %88 = vector.extract_strided_slice %87 {offsets = [0, 0], sizes = [1, 256], strides = [1, 1]} : vector<1x512xf32> to vector<1x256xf32>
    %89 = arith.negf %88 : vector<1x256xf32>
    %90 = math.exp %89 : vector<1x256xf32>
    %cst_19 = arith.constant 1.000000e+00 : f32
    %91 = vector.broadcast %cst_19 : f32 to vector<1x256xf32>
    %92 = arith.addf %91, %90 : vector<1x256xf32>
    %93 = arith.divf %91, %92 : vector<1x256xf32>
    %94 = vector.extract_strided_slice %87 {offsets = [0, 256], sizes = [1, 128], strides = [1, 1]} : vector<1x512xf32> to vector<1x128xf32>
    %95 = math.tanh %94 : vector<1x128xf32>
    %96 = vector.extract_strided_slice %87 {offsets = [0, 384], sizes = [1, 128], strides = [1, 1]} : vector<1x512xf32> to vector<1x128xf32>
    %97 = arith.negf %96 : vector<1x128xf32>
    %98 = math.exp %97 : vector<1x128xf32>
    %cst_20 = arith.constant 1.000000e+00 : f32
    %99 = vector.broadcast %cst_20 : f32 to vector<1x128xf32>
    %100 = arith.addf %99, %98 : vector<1x128xf32>
    %101 = arith.divf %99, %100 : vector<1x128xf32>
    %102 = vector.extract_strided_slice %93 {offsets = [0, 0], sizes = [1, 128], strides = [1, 1]} : vector<1x256xf32> to vector<1x128xf32>
    %103 = vector.extract_strided_slice %93 {offsets = [0, 128], sizes = [1, 128], strides = [1, 1]} : vector<1x256xf32> to vector<1x128xf32>
    %104 = arith.mulf %103, %81 : vector<1x128xf32>
    %105 = arith.mulf %102, %95 : vector<1x128xf32>
    %106 = arith.addf %104, %105 : vector<1x128xf32>
    %107 = math.tanh %106 : vector<1x128xf32>
    %108 = arith.mulf %101, %107 : vector<1x128xf32>
    %109 = vector.extract_strided_slice %5 {offsets = [4, 0], sizes = [1, 512], strides = [1, 1]} : vector<8x512xf32> to vector<1x512xf32>
    %110 = arith.truncf %108 : vector<1x128xf32> to vector<1x128xbf16>
    %cst_21 = arith.constant dense<0.000000e+00> : vector<1x512xf32>
    %111 = tpu.matmul %110, %6, %cst_21 {dimension_numbers = #tpu.dot_dimension_numbers<[1], [0], [0], [1], [0, 0, 1, 1], [], []>} : vector<1x128xbf16>, vector<128x512xbf16>, vector<1x512xf32> -> vector<1x512xf32>
    %112 = arith.addf %109, %111 : vector<1x512xf32>
    %113 = vector.extract_strided_slice %112 {offsets = [0, 0], sizes = [1, 256], strides = [1, 1]} : vector<1x512xf32> to vector<1x256xf32>
    %114 = arith.negf %113 : vector<1x256xf32>
    %115 = math.exp %114 : vector<1x256xf32>
    %cst_22 = arith.constant 1.000000e+00 : f32
    %116 = vector.broadcast %cst_22 : f32 to vector<1x256xf32>
    %117 = arith.addf %116, %115 : vector<1x256xf32>
    %118 = arith.divf %116, %117 : vector<1x256xf32>
    %119 = vector.extract_strided_slice %112 {offsets = [0, 256], sizes = [1, 128], strides = [1, 1]} : vector<1x512xf32> to vector<1x128xf32>
    %120 = math.tanh %119 : vector<1x128xf32>
    %121 = vector.extract_strided_slice %112 {offsets = [0, 384], sizes = [1, 128], strides = [1, 1]} : vector<1x512xf32> to vector<1x128xf32>
    %122 = arith.negf %121 : vector<1x128xf32>
    %123 = math.exp %122 : vector<1x128xf32>
    %cst_23 = arith.constant 1.000000e+00 : f32
    %124 = vector.broadcast %cst_23 : f32 to vector<1x128xf32>
    %125 = arith.addf %124, %123 : vector<1x128xf32>
    %126 = arith.divf %124, %125 : vector<1x128xf32>
    %127 = vector.extract_strided_slice %118 {offsets = [0, 0], sizes = [1, 128], strides = [1, 1]} : vector<1x256xf32> to vector<1x128xf32>
    %128 = vector.extract_strided_slice %118 {offsets = [0, 128], sizes = [1, 128], strides = [1, 1]} : vector<1x256xf32> to vector<1x128xf32>
    %129 = arith.mulf %128, %106 : vector<1x128xf32>
    %130 = arith.mulf %127, %120 : vector<1x128xf32>
    %131 = arith.addf %129, %130 : vector<1x128xf32>
    %132 = math.tanh %131 : vector<1x128xf32>
    %133 = arith.mulf %126, %132 : vector<1x128xf32>
    %134 = vector.extract_strided_slice %5 {offsets = [5, 0], sizes = [1, 512], strides = [1, 1]} : vector<8x512xf32> to vector<1x512xf32>
    %135 = arith.truncf %133 : vector<1x128xf32> to vector<1x128xbf16>
    %cst_24 = arith.constant dense<0.000000e+00> : vector<1x512xf32>
    %136 = tpu.matmul %135, %6, %cst_24 {dimension_numbers = #tpu.dot_dimension_numbers<[1], [0], [0], [1], [0, 0, 1, 1], [], []>} : vector<1x128xbf16>, vector<128x512xbf16>, vector<1x512xf32> -> vector<1x512xf32>
    %137 = arith.addf %134, %136 : vector<1x512xf32>
    %138 = vector.extract_strided_slice %137 {offsets = [0, 0], sizes = [1, 256], strides = [1, 1]} : vector<1x512xf32> to vector<1x256xf32>
    %139 = arith.negf %138 : vector<1x256xf32>
    %140 = math.exp %139 : vector<1x256xf32>
    %cst_25 = arith.constant 1.000000e+00 : f32
    %141 = vector.broadcast %cst_25 : f32 to vector<1x256xf32>
    %142 = arith.addf %141, %140 : vector<1x256xf32>
    %143 = arith.divf %141, %142 : vector<1x256xf32>
    %144 = vector.extract_strided_slice %137 {offsets = [0, 256], sizes = [1, 128], strides = [1, 1]} : vector<1x512xf32> to vector<1x128xf32>
    %145 = math.tanh %144 : vector<1x128xf32>
    %146 = vector.extract_strided_slice %137 {offsets = [0, 384], sizes = [1, 128], strides = [1, 1]} : vector<1x512xf32> to vector<1x128xf32>
    %147 = arith.negf %146 : vector<1x128xf32>
    %148 = math.exp %147 : vector<1x128xf32>
    %cst_26 = arith.constant 1.000000e+00 : f32
    %149 = vector.broadcast %cst_26 : f32 to vector<1x128xf32>
    %150 = arith.addf %149, %148 : vector<1x128xf32>
    %151 = arith.divf %149, %150 : vector<1x128xf32>
    %152 = vector.extract_strided_slice %143 {offsets = [0, 0], sizes = [1, 128], strides = [1, 1]} : vector<1x256xf32> to vector<1x128xf32>
    %153 = vector.extract_strided_slice %143 {offsets = [0, 128], sizes = [1, 128], strides = [1, 1]} : vector<1x256xf32> to vector<1x128xf32>
    %154 = arith.mulf %153, %131 : vector<1x128xf32>
    %155 = arith.mulf %152, %145 : vector<1x128xf32>
    %156 = arith.addf %154, %155 : vector<1x128xf32>
    %157 = math.tanh %156 : vector<1x128xf32>
    %158 = arith.mulf %151, %157 : vector<1x128xf32>
    %159 = vector.extract_strided_slice %5 {offsets = [6, 0], sizes = [1, 512], strides = [1, 1]} : vector<8x512xf32> to vector<1x512xf32>
    %160 = arith.truncf %158 : vector<1x128xf32> to vector<1x128xbf16>
    %cst_27 = arith.constant dense<0.000000e+00> : vector<1x512xf32>
    %161 = tpu.matmul %160, %6, %cst_27 {dimension_numbers = #tpu.dot_dimension_numbers<[1], [0], [0], [1], [0, 0, 1, 1], [], []>} : vector<1x128xbf16>, vector<128x512xbf16>, vector<1x512xf32> -> vector<1x512xf32>
    %162 = arith.addf %159, %161 : vector<1x512xf32>
    %163 = vector.extract_strided_slice %162 {offsets = [0, 0], sizes = [1, 256], strides = [1, 1]} : vector<1x512xf32> to vector<1x256xf32>
    %164 = arith.negf %163 : vector<1x256xf32>
    %165 = math.exp %164 : vector<1x256xf32>
    %cst_28 = arith.constant 1.000000e+00 : f32
    %166 = vector.broadcast %cst_28 : f32 to vector<1x256xf32>
    %167 = arith.addf %166, %165 : vector<1x256xf32>
    %168 = arith.divf %166, %167 : vector<1x256xf32>
    %169 = vector.extract_strided_slice %162 {offsets = [0, 256], sizes = [1, 128], strides = [1, 1]} : vector<1x512xf32> to vector<1x128xf32>
    %170 = math.tanh %169 : vector<1x128xf32>
    %171 = vector.extract_strided_slice %162 {offsets = [0, 384], sizes = [1, 128], strides = [1, 1]} : vector<1x512xf32> to vector<1x128xf32>
    %172 = arith.negf %171 : vector<1x128xf32>
    %173 = math.exp %172 : vector<1x128xf32>
    %cst_29 = arith.constant 1.000000e+00 : f32
    %174 = vector.broadcast %cst_29 : f32 to vector<1x128xf32>
    %175 = arith.addf %174, %173 : vector<1x128xf32>
    %176 = arith.divf %174, %175 : vector<1x128xf32>
    %177 = vector.extract_strided_slice %168 {offsets = [0, 0], sizes = [1, 128], strides = [1, 1]} : vector<1x256xf32> to vector<1x128xf32>
    %178 = vector.extract_strided_slice %168 {offsets = [0, 128], sizes = [1, 128], strides = [1, 1]} : vector<1x256xf32> to vector<1x128xf32>
    %179 = arith.mulf %178, %156 : vector<1x128xf32>
    %180 = arith.mulf %177, %170 : vector<1x128xf32>
    %181 = arith.addf %179, %180 : vector<1x128xf32>
    %182 = math.tanh %181 : vector<1x128xf32>
    %183 = arith.mulf %176, %182 : vector<1x128xf32>
    %184 = vector.extract_strided_slice %5 {offsets = [7, 0], sizes = [1, 512], strides = [1, 1]} : vector<8x512xf32> to vector<1x512xf32>
    %185 = arith.truncf %183 : vector<1x128xf32> to vector<1x128xbf16>
    %cst_30 = arith.constant dense<0.000000e+00> : vector<1x512xf32>
    %186 = tpu.matmul %185, %6, %cst_30 {dimension_numbers = #tpu.dot_dimension_numbers<[1], [0], [0], [1], [0, 0, 1, 1], [], []>} : vector<1x128xbf16>, vector<128x512xbf16>, vector<1x512xf32> -> vector<1x512xf32>
    %187 = arith.addf %184, %186 : vector<1x512xf32>
    %188 = vector.extract_strided_slice %187 {offsets = [0, 0], sizes = [1, 256], strides = [1, 1]} : vector<1x512xf32> to vector<1x256xf32>
    %189 = arith.negf %188 : vector<1x256xf32>
    %190 = math.exp %189 : vector<1x256xf32>
    %cst_31 = arith.constant 1.000000e+00 : f32
    %191 = vector.broadcast %cst_31 : f32 to vector<1x256xf32>
    %192 = arith.addf %191, %190 : vector<1x256xf32>
    %193 = arith.divf %191, %192 : vector<1x256xf32>
    %194 = vector.extract_strided_slice %187 {offsets = [0, 256], sizes = [1, 128], strides = [1, 1]} : vector<1x512xf32> to vector<1x128xf32>
    %195 = math.tanh %194 : vector<1x128xf32>
    %196 = vector.extract_strided_slice %187 {offsets = [0, 384], sizes = [1, 128], strides = [1, 1]} : vector<1x512xf32> to vector<1x128xf32>
    %197 = arith.negf %196 : vector<1x128xf32>
    %198 = math.exp %197 : vector<1x128xf32>
    %cst_32 = arith.constant 1.000000e+00 : f32
    %199 = vector.broadcast %cst_32 : f32 to vector<1x128xf32>
    %200 = arith.addf %199, %198 : vector<1x128xf32>
    %201 = arith.divf %199, %200 : vector<1x128xf32>
    %202 = vector.extract_strided_slice %193 {offsets = [0, 0], sizes = [1, 128], strides = [1, 1]} : vector<1x256xf32> to vector<1x128xf32>
    %203 = vector.extract_strided_slice %193 {offsets = [0, 128], sizes = [1, 128], strides = [1, 1]} : vector<1x256xf32> to vector<1x128xf32>
    %204 = arith.mulf %203, %181 : vector<1x128xf32>
    %205 = arith.mulf %202, %195 : vector<1x128xf32>
    %206 = arith.addf %204, %205 : vector<1x128xf32>
    %207 = math.tanh %206 : vector<1x128xf32>
    %208 = arith.mulf %201, %207 : vector<1x128xf32>
    %c0_33 = arith.constant 0 : index
    %c0_34 = arith.constant 0 : index
    %209 = vector.load %arg4[%c0_33, %c0_34] : memref<1x128xf32, #tpu.memory_space<vmem>>, vector<1x128xf32>
    %210 = arith.mulf %208, %209 : vector<1x128xf32>
    %cst_35 = arith.constant dense<0.000000e+00> : vector<1xf32>
    %211 = vector.multi_reduction <add>, %210, %cst_35 [1] : vector<1x128xf32> to vector<1xf32>
    %212 = vector.shape_cast %211 : vector<1xf32> to vector<1x1xf32>
    %c0_36 = arith.constant 0 : index
    %c0_37 = arith.constant 0 : index
    %213 = vector.load %arg5[%c0_36, %c0_37] : memref<1x1xf32, #tpu.memory_space<vmem>>, vector<1x1xf32>
    %214 = arith.addf %212, %213 : vector<1x1xf32>
    %c0_38 = arith.constant 0 : index
    %c0_39 = arith.constant 0 : index
    %215 = vector.load %arg6[%c0_38, %c0_39] : memref<1x1xf32, #tpu.memory_space<vmem>>, vector<1x1xf32>
    tpu.vector_store %arg6[%c0_38, %c0_39], %214 {strides = array<i32>} : memref<1x1xf32, #tpu.memory_space<vmem>>, vector<1x1xf32>,
    return
  }
}

</mosaic_0001>

<llo_original>
// kernel: tpu_custom_call.1
$region0: #{tpu_custom_call.1}
  #allocation0 [shape = 'u32[]', space=smem, size = 0x4, offset = 0x4, fixed_abs, tag = 'smem constant byte address 0x4 - core index']
  #allocation1 [shape = 'u32[144,128]{1,0:T(1,128)}', space=vmem, size = 0x12000, scoped, tag = 'internal scratch']
  #allocation2 [shape = 'f32[1,1]{1,0:T(1,128)S(1)}', space=vmem, size = 0x200, scoped, tag = 'scoped memory for tpu_custom_call.1']
  %s0 = inlined_call_operand.vmem [shape: f32[8,1], index: 0, kind: input, shape index: {}]
  %s1 = inlined_call_operand.vmem [shape: f32[1,512], index: 1, kind: input, shape index: {}]
  %s2 = inlined_call_operand.hbm [shape: bf16[128,512], index: 2, kind: input, shape index: {}]
  %s3 = inlined_call_operand.vmem [shape: f32[1,512], index: 3, kind: input, shape index: {}]
  %s4 = inlined_call_operand.vmem [shape: f32[1,128], index: 4, kind: input, shape index: {}]
  %s5 = inlined_call_operand.<no memory space> [shape: f32[1,1], index: 5, kind: input, shape index: {}]
  %s6 = inlined_call_operand.hbm [shape: f32[1,1], index: 6, kind: output, shape index: {}]
  %s7 = sld [smem:[#allocation0]]
  $region38: #{tpu_custom_call.1} parent=0
    _
  %s9 = ssub.s32 1, %s7
  %s10 = scalar_select 0, %s9, %s7
  %v11 = vstv %s5
  %12 = vst [vmem:[#allocation2] sm:$0x1] %v11
  $region1: #{tpu_custom_call.1} parent=0
    #allocation3 [shape = 'u8[131072]{0}', space=vmem, size = 0x20000, scoped, tag = 'input window, operand 2, single buffered']
    #allocation4 [shape = 's32[1]{0}', space=sflag, size = 0x4, scoped, tag = 'scoped memory for tpu_custom_call.1']
    #allocation5 [shape = 's32[1]{0}', space=sflag, size = 0x4, scoped, tag = 'scoped memory for tpu_custom_call.1']
    #allocation6 [shape = 'u8[512]{0}', space=vmem, size = 0x400, scoped, tag = 'output window, operand 0, single buffered']
    %13 = vsyncpa [#allocation4], 0
    %14 = vsyncpa [#allocation5], 0
    // Predicated region
    $region2: #{tpu_custom_call.1} parent=1 // pred_check
      _
    $region3: #{tpu_custom_call.1} parent=1 // pred_check_branch
      %16 = sbr.rel (0) target = $region5
    $region4: #{tpu_custom_call.1} parent=1 // pred_region
      _
    $region5: #{tpu_custom_call.1} parent=1 // pred_fallthru
      _
    // Predicated region
    $region6: #{tpu_custom_call.1} parent=1 // pred_check
      _
    $region7: #{tpu_custom_call.1} parent=1 // pred_check_branch
      %18 = sbr.rel (0) target = $region9
    $region8: #{tpu_custom_call.1} parent=1 // pred_region
      _
    $region9: #{tpu_custom_call.1} parent=1 // pred_fallthru
      _
    // Predicated region
    $region10: #{tpu_custom_call.1} parent=1 // pred_check
      _
    $region11: #{tpu_custom_call.1} parent=1 // pred_check_branch
      %20 = sbr.rel (0) target = $region13
    $region12: #{tpu_custom_call.1} parent=1 // pred_region
      %s22 = ssub.s32 4096, 4096
      %23 = vsyncadd [#allocation4], %s22
      %s24 = sshll.u32 [#allocation3], 4
      %s25 = int_to_ptr.vmem [resolvable:$true] %s24
      %30 = dma.hbm_to_vmem [thread:$0]  %s2, 4096, %s25, [#allocation4], 256, 256, 16
    $region13: #{tpu_custom_call.1} parent=1 // pred_fallthru
      _
    // Predicated region
    $region14: #{tpu_custom_call.1} parent=1 // pred_check
      _
    $region15: #{tpu_custom_call.1} parent=1 // pred_check_branch
      %32 = sbr.rel (0) target = $region17
    $region16: #{tpu_custom_call.1} parent=1 // pred_region
      _
    $region17: #{tpu_custom_call.1} parent=1 // pred_fallthru
      _
    // Predicated region
    $region18: #{tpu_custom_call.1} parent=1 // pred_check
      _
    $region19: #{tpu_custom_call.1} parent=1 // pred_check_branch
      %34 = sbr.rel (0) target = $region21
    $region20: #{tpu_custom_call.1} parent=1 // pred_region
      _
    $region21: #{tpu_custom_call.1} parent=1 // pred_fallthru
      _
    // Predicated region
    $region22: #{tpu_custom_call.1} parent=1 // pred_check
      _
    $region23: #{tpu_custom_call.1} parent=1 // pred_check_branch
      %36 = sbr.rel (0) target = $region25
    $region24: #{tpu_custom_call.1} parent=1 // pred_region
      _
    $region25: #{tpu_custom_call.1} parent=1 // pred_fallthru
      _
    // Predicated region
    $region26: #{tpu_custom_call.1} parent=1 // pred_check
      _
    $region27: #{tpu_custom_call.1} parent=1 // pred_check_branch
      %38 = sbr.rel (0) target = $region29
    $region28: #{tpu_custom_call.1} parent=1 // pred_region
      %39 = dma.done [#allocation4], 4096
    $region29: #{tpu_custom_call.1} parent=1 // pred_fallthru
      _
    %v41 = vld [vmem:[%s0] sm:$0xff]
    %v42 = vld [vmem:[%s1] sm:$0xf]
    %v43 = vld [vmem:[%s3] sm:$0xf]
    %v45 = vlaneseq
    %v46 = vshrl.u32 %v45, 7
    %v47 = vsub.s32 0, %v46
    %v48 = vrot.slane %v43, %v47
    %v49 = vlaneseq
    %v50 = vshrl.u32 %v49, 7
    %v51 = vsub.s32 1, %v50
    %v52 = vrot.slane %v43, %v51
    %v53 = vlaneseq
    %v54 = vshrl.u32 %v53, 7
    %v55 = vsub.s32 2, %v54
    %v56 = vrot.slane %v43, %v55
    %v57 = vlaneseq
    %v58 = vshrl.u32 %v57, 7
    %v59 = vsub.s32 3, %v58
    %v60 = vrot.slane %v43, %v59
    %v66 = vlaneseq
    %v67 = vshrl.u32 %v66, 7
    %v68 = vsub.s32 0, %v67
    %v69 = vrot.slane %v42, %v68
    %v70 = vlaneseq
    %v71 = vshrl.u32 %v70, 7
    %v72 = vsub.s32 1, %v71
    %v73 = vrot.slane %v42, %v72
    %v74 = vlaneseq
    %v75 = vshrl.u32 %v74, 7
    %v76 = vsub.s32 2, %v75
    %v77 = vrot.slane %v42, %v76
    %v78 = vlaneseq
    %v79 = vshrl.u32 %v78, 7
    %v80 = vsub.s32 3, %v79
    %v81 = vrot.slane %v42, %v80
    %vm82 = vcmask 7168
    %v84 = vsel %vm82, %v41, 0
    %vm86 = vcmask 1040384
    %v87 = vsel %vm86, %v69, 0
    %v89 = vsel %vm86, %v73, 0
    %v91 = vsel %vm86, %v77, 0
    %v93 = vsel %vm86, %v81, 0
    %95 = vmatprep.subr.mxu0 %v89
    %96 = vmatpush1.msra.mxu0 %v87
    %97 = vmatprep.subr.mxu0 0.0
    %98 = vmatpush1.msra.mxu0 0.0
    %99 = vmatprep.subr.mxu0 0.0
    %100 = vmatpush1.msra.mxu0 0.0
    %101 = vmatprep.subr.mxu0 0.0
    %102 = vmatpush1.msra.mxu0 0.0
    %103 = vmatprep.subr.mxu0 0.0
    %104 = vmatpush1.msra.mxu0 0.0
    %105 = vmatprep.subr.mxu0 0.0
    %106 = vmatpush1.msra.mxu0 0.0
    %107 = vmatprep.subr.mxu0 0.0
    %108 = vmatpush1.msra.mxu0 0.0
    %109 = vmatprep.subr.mxu0 0.0
    %110 = vmatpush1.msra.mxu0 0.0
    %111 = vmatprep.subr.mxu0 0.0
    %112 = vmatpush1.msra.mxu0 0.0
    %113 = vmatprep.subr.mxu0 0.0
    %114 = vmatpush1.msra.mxu0 0.0
    %115 = vmatprep.subr.mxu0 0.0
    %116 = vmatpush1.msra.mxu0 0.0
    %117 = vmatprep.subr.mxu0 0.0
    %118 = vmatpush1.msra.mxu0 0.0
    %119 = vmatprep.subr.mxu0 0.0
    %120 = vmatpush1.msra.mxu0 0.0
    %121 = vmatprep.subr.mxu0 0.0
    %122 = vmatpush1.msra.mxu0 0.0
    %123 = vmatprep.subr.mxu0 0.0
    %124 = vmatpush1.msra.mxu0 0.0
    %125 = vmatprep.subr.mxu0 0.0
    %126 = vmatpush1.msra.mxu0 0.0
    %127 = vmatprep.subr.mxu0 0.0
    %128 = vmatpush1.msra.mxu0 0.0
    %129 = vmatprep.subr.mxu0 0.0
    %130 = vmatpush1.msra.mxu0 0.0
    %131 = vmatprep.subr.mxu0 0.0
    %132 = vmatpush1.msra.mxu0 0.0
    %133 = vmatprep.subr.mxu0 0.0
    %134 = vmatpush1.msra.mxu0 0.0
    %135 = vmatprep.subr.mxu0 0.0
    %136 = vmatpush1.msra.mxu0 0.0
    %137 = vmatprep.subr.mxu0 0.0
    %138 = vmatpush1.msra.mxu0 0.0
    %139 = vmatprep.subr.mxu0 0.0
    %140 = vmatpush1.msra.mxu0 0.0
    %141 = vmatprep.subr.mxu0 0.0
    %142 = vmatpush1.msra.mxu0 0.0
    %143 = vmatprep.subr.mxu0 0.0
    %144 = vmatpush1.msra.mxu0 0.0
    %145 = vmatprep.subr.mxu0 0.0
    %146 = vmatpush1.msra.mxu0 0.0
    %147 = vmatprep.subr.mxu0 0.0
    %148 = vmatpush1.msra.mxu0 0.0
    %149 = vmatprep.subr.mxu0 0.0
    %150 = vmatpush1.msra.mxu0 0.0
    %151 = vmatprep.subr.mxu0 0.0
    %152 = vmatpush1.msra.mxu0 0.0
    %153 = vmatprep.subr.mxu0 0.0
    %154 = vmatpush1.msra.mxu0 0.0
    %155 = vmatprep.subr.mxu0 0.0
    %156 = vmatpush1.msra.mxu0 0.0
    %157 = vmatprep.subr.mxu0 0.0
    %158 = vmatpush1.msra.mxu0 0.0
    %159 = vmatprep.mubr.f32.mxu0 0.0
    %160 = vmatmul.mubr.f32.gmra.mrb[0].mxu0 %v84
    %v161 = vpop.f32.mrb[0].mxu0
    %v162 = vadd.f32 %v48, %v161
    %v163 = vpop.f32.mrb[0].mxu0
    %v164 = vadd.f32 %v52, %v163
    %165 = vdwg.mxu0
    %166 = vmatprep.subr.mxu0 %v93
    %167 = vmatpush1.msra.mxu0 %v91
    %168 = vmatprep.subr.mxu0 0.0
    %169 = vmatpush1.msra.mxu0 0.0
    %170 = vmatprep.subr.mxu0 0.0
    %171 = vmatpush1.msra.mxu0 0.0
    %172 = vmatprep.subr.mxu0 0.0
    %173 = vmatpush1.msra.mxu0 0.0
    %174 = vmatprep.subr.mxu0 0.0
    %175 = vmatpush1.msra.mxu0 0.0
    %176 = vmatprep.subr.mxu0 0.0
    %177 = vmatpush1.msra.mxu0 0.0
    %178 = vmatprep.subr.mxu0 0.0
    %179 = vmatpush1.msra.mxu0 0.0
    %180 = vmatprep.subr.mxu0 0.0
    %181 = vmatpush1.msra.mxu0 0.0
    %182 = vmatprep.subr.mxu0 0.0
    %183 = vmatpush1.msra.mxu0 0.0
    %184 = vmatprep.subr.mxu0 0.0
    %185 = vmatpush1.msra.mxu0 0.0
    %186 = vmatprep.subr.mxu0 0.0
    %187 = vmatpush1.msra.mxu0 0.0
    %188 = vmatprep.subr.mxu0 0.0
    %189 = vmatpush1.msra.mxu0 0.0
    %190 = vmatprep.subr.mxu0 0.0
    %191 = vmatpush1.msra.mxu0 0.0
    %192 = vmatprep.subr.mxu0 0.0
    %193 = vmatpush1.msra.mxu0 0.0
    %194 = vmatprep.subr.mxu0 0.0
    %195 = vmatpush1.msra.mxu0 0.0
    %196 = vmatprep.subr.mxu0 0.0
    %197 = vmatpush1.msra.mxu0 0.0
    %198 = vmatprep.subr.mxu0 0.0
    %199 = vmatpush1.msra.mxu0 0.0
    %200 = vmatprep.subr.mxu0 0.0
    %201 = vmatpush1.msra.mxu0 0.0
    %202 = vmatprep.subr.mxu0 0.0
    %203 = vmatpush1.msra.mxu0 0.0
    %204 = vmatprep.subr.mxu0 0.0
    %205 = vmatpush1.msra.mxu0 0.0
    %206 = vmatprep.subr.mxu0 0.0
    %207 = vmatpush1.msra.mxu0 0.0
    %208 = vmatprep.subr.mxu0 0.0
    %209 = vmatpush1.msra.mxu0 0.0
    %210 = vmatprep.subr.mxu0 0.0
    %211 = vmatpush1.msra.mxu0 0.0
    %212 = vmatprep.subr.mxu0 0.0
    %213 = vmatpush1.msra.mxu0 0.0
    %214 = vmatprep.subr.mxu0 0.0
    %215 = vmatpush1.msra.mxu0 0.0
    %216 = vmatprep.subr.mxu0 0.0
    %217 = vmatpush1.msra.mxu0 0.0
    %218 = vmatprep.subr.mxu0 0.0
    %219 = vmatpush1.msra.mxu0 0.0
    %220 = vmatprep.subr.mxu0 0.0
    %221 = vmatpush1.msra.mxu0 0.0
    %222 = vmatprep.subr.mxu0 0.0
    %223 = vmatpush1.msra.mxu0 0.0
    %224 = vmatprep.subr.mxu0 0.0
    %225 = vmatpush1.msra.mxu0 0.0
    %226 = vmatprep.subr.mxu0 0.0
    %227 = vmatpush1.msra.mxu0 0.0
    %228 = vmatprep.subr.mxu0 0.0
    %229 = vmatpush1.msra.mxu0 0.0
    %230 = vmatprep.mubr.f32.mxu0 0.0
    %231 = vmatmul.mubr.f32.gmra.mrb[0].mxu0 %v84
    %v232 = vpop.f32.mrb[0].mxu0
    %v233 = vadd.f32 %v56, %v232
    %v234 = vpop.f32.mrb[0].mxu0
    %v235 = vadd.f32 %v60, %v234
    %236 = vdwg.mxu0
    %v237 = vld [vmem:[#allocation3] sm:$0xff]
    %v238 = vld [vmem:[#allocation3 + $0x8] sm:$0xff]
    %v239 = vld [vmem:[#allocation3 + $0x10] sm:$0xff]
    %v240 = vld [vmem:[#allocation3 + $0x18] sm:$0xff]
    %v241 = vld [vmem:[#allocation3 + $0x20] sm:$0xff]
    %v242 = vld [vmem:[#allocation3 + $0x28] sm:$0xff]
    %v243 = vld [vmem:[#allocation3 + $0x30] sm:$0xff]
    %v244 = vld [vmem:[#allocation3 + $0x38] sm:$0xff]
    %v245 = vld [vmem:[#allocation3 + $0x40] sm:$0xff]
    %v246 = vld [vmem:[#allocation3 + $0x48] sm:$0xff]
    %v247 = vld [vmem:[#allocation3 + $0x50] sm:$0xff]
    %v248 = vld [vmem:[#allocation3 + $0x58] sm:$0xff]
    %v249 = vld [vmem:[#allocation3 + $0x60] sm:$0xff]
    %v250 = vld [vmem:[#allocation3 + $0x68] sm:$0xff]
    %v251 = vld [vmem:[#allocation3 + $0x70] sm:$0xff]
    %v252 = vld [vmem:[#allocation3 + $0x78] sm:$0xff]
    %v253 = vld [vmem:[#allocation3 + $0x80] sm:$0xff]
    %v254 = vld [vmem:[#allocation3 + $0x88] sm:$0xff]
    %v255 = vld [vmem:[#allocation3 + $0x90] sm:$0xff]
    %v256 = vld [vmem:[#allocation3 + $0x98] sm:$0xff]
    %v257 = vld [vmem:[#allocation3 + $0xa0] sm:$0xff]
    %v258 = vld [vmem:[#allocation3 + $0xa8] sm:$0xff]
    %v259 = vld [vmem:[#allocation3 + $0xb0] sm:$0xff]
    %v260 = vld [vmem:[#allocation3 + $0xb8] sm:$0xff]
    %v261 = vld [vmem:[#allocation3 + $0xc0] sm:$0xff]
    %v262 = vld [vmem:[#allocation3 + $0xc8] sm:$0xff]
    %v263 = vld [vmem:[#allocation3 + $0xd0] sm:$0xff]
    %v264 = vld [vmem:[#allocation3 + $0xd8] sm:$0xff]
    %v265 = vld [vmem:[#allocation3 + $0xe0] sm:$0xff]
    %v266 = vld [vmem:[#allocation3 + $0xe8] sm:$0xff]
    %v267 = vld [vmem:[#allocation3 + $0xf0] sm:$0xff]
    %v268 = vld [vmem:[#allocation3 + $0xf8] sm:$0xff]
    %v301 = vunpack.c.l.b16 %v237
    %v302 = vunpack.c.h.b16 %v237
    %v303 = vunpack.c.l.b16 %v238
    %v304 = vunpack.c.h.b16 %v238
    %v305 = vunpack.c.l.b16 %v239
    %v306 = vunpack.c.h.b16 %v239
    %v307 = vunpack.c.l.b16 %v240
    %v308 = vunpack.c.h.b16 %v240
    %v309 = vunpack.c.l.b16 %v241
    %v310 = vunpack.c.h.b16 %v241
    %v311 = vunpack.c.l.b16 %v242
    %v312 = vunpack.c.h.b16 %v242
    %v313 = vunpack.c.l.b16 %v243
    %v314 = vunpack.c.h.b16 %v243
    %v315 = vunpack.c.l.b16 %v244
    %v316 = vunpack.c.h.b16 %v244
    %v317 = vunpack.c.l.b16 %v245
    %v318 = vunpack.c.h.b16 %v245
    %v319 = vunpack.c.l.b16 %v246
    %v320 = vunpack.c.h.b16 %v246
    %v321 = vunpack.c.l.b16 %v247
    %v322 = vunpack.c.h.b16 %v247
    %v323 = vunpack.c.l.b16 %v248
    %v324 = vunpack.c.h.b16 %v248
    %v325 = vunpack.c.l.b16 %v249
    %v326 = vunpack.c.h.b16 %v249
    %v327 = vunpack.c.l.b16 %v250
    %v328 = vunpack.c.h.b16 %v250
    %v329 = vunpack.c.l.b16 %v251
    %v330 = vunpack.c.h.b16 %v251
    %v331 = vunpack.c.l.b16 %v252
    %v332 = vunpack.c.h.b16 %v252
    %v333 = vunpack.c.l.b16 %v253
    %v334 = vunpack.c.h.b16 %v253
    %v335 = vunpack.c.l.b16 %v254
    %v336 = vunpack.c.h.b16 %v254
    %v337 = vunpack.c.l.b16 %v255
    %v338 = vunpack.c.h.b16 %v255
    %v339 = vunpack.c.l.b16 %v256
    %v340 = vunpack.c.h.b16 %v256
    %v341 = vunpack.c.l.b16 %v257
    %v342 = vunpack.c.h.b16 %v257
    %v343 = vunpack.c.l.b16 %v258
    %v344 = vunpack.c.h.b16 %v258
    %v345 = vunpack.c.l.b16 %v259
    %v346 = vunpack.c.h.b16 %v259
    %v347 = vunpack.c.l.b16 %v260
    %v348 = vunpack.c.h.b16 %v260
    %v349 = vunpack.c.l.b16 %v261
    %v350 = vunpack.c.h.b16 %v261
    %v351 = vunpack.c.l.b16 %v262
    %v352 = vunpack.c.h.b16 %v262
    %v353 = vunpack.c.l.b16 %v263
    %v354 = vunpack.c.h.b16 %v263
    %v355 = vunpack.c.l.b16 %v264
    %v356 = vunpack.c.h.b16 %v264
    %v357 = vunpack.c.l.b16 %v265
    %v358 = vunpack.c.h.b16 %v265
    %v359 = vunpack.c.l.b16 %v266
    %v360 = vunpack.c.h.b16 %v266
    %v361 = vunpack.c.l.b16 %v267
    %v362 = vunpack.c.h.b16 %v267
    %v363 = vunpack.c.l.b16 %v268
    %v364 = vunpack.c.h.b16 %v268
    %v365 = vpack.c.b16 %v305, %v301
    %v366 = vpack.c.b16 %v306, %v302
    %v367 = vpack.c.b16 %v307, %v303
    %v368 = vpack.c.b16 %v308, %v304
    %v369 = vpack.c.b16 %v313, %v309
    %v370 = vpack.c.b16 %v314, %v310
    %v371 = vpack.c.b16 %v315, %v311
    %v372 = vpack.c.b16 %v316, %v312
    %v373 = vpack.c.b16 %v321, %v317
    %v374 = vpack.c.b16 %v322, %v318
    %v375 = vpack.c.b16 %v323, %v319
    %v376 = vpack.c.b16 %v324, %v320
    %v377 = vpack.c.b16 %v329, %v325
    %v378 = vpack.c.b16 %v330, %v326
    %v379 = vpack.c.b16 %v331, %v327
    %v380 = vpack.c.b16 %v332, %v328
    %v381 = vpack.c.b16 %v337, %v333
    %v382 = vpack.c.b16 %v338, %v334
    %v383 = vpack.c.b16 %v339, %v335
    %v384 = vpack.c.b16 %v340, %v336
    %v385 = vpack.c.b16 %v345, %v341
    %v386 = vpack.c.b16 %v346, %v342
    %v387 = vpack.c.b16 %v347, %v343
    %v388 = vpack.c.b16 %v348, %v344
    %v389 = vpack.c.b16 %v353, %v349
    %v390 = vpack.c.b16 %v354, %v350
    %v391 = vpack.c.b16 %v355, %v351
    %v392 = vpack.c.b16 %v356, %v352
    %v393 = vpack.c.b16 %v361, %v357
    %v394 = vpack.c.b16 %v362, %v358
    %v395 = vpack.c.b16 %v363, %v359
    %v396 = vpack.c.b16 %v364, %v360
    %429 = vmatprep.subr.bf16.mxu0 %v366
    %430 = vmatpush1.bf16.msra.mxu0 %v365
    %431 = vmatprep.subr.bf16.mxu0 %v370
    %432 = vmatpush1.bf16.msra.mxu0 %v369
    %433 = vmatprep.subr.bf16.mxu0 %v374
    %434 = vmatpush1.bf16.msra.mxu0 %v373
    %435 = vmatprep.subr.bf16.mxu0 %v378
    %436 = vmatpush1.bf16.msra.mxu0 %v377
    %437 = vmatprep.subr.bf16.mxu0 %v382
    %438 = vmatpush1.bf16.msra.mxu0 %v381
    %439 = vmatprep.subr.bf16.mxu0 %v386
    %440 = vmatpush1.bf16.msra.mxu0 %v385
    %441 = vmatprep.subr.bf16.mxu0 %v390
    %442 = vmatpush1.bf16.msra.mxu0 %v389
    %443 = vmatprep.subr.bf16.mxu0 %v394
    %444 = vmatpush1.bf16.msra.mxu0 %v393
    %445 = vmatprep.subr.bf16.mxu0 0
    %446 = vmatpush1.bf16.msra.mxu0 0
    %447 = vmatprep.subr.bf16.mxu0 0
    %448 = vmatpush1.bf16.msra.mxu0 0
    %449 = vmatprep.subr.bf16.mxu0 0
    %450 = vmatpush1.bf16.msra.mxu0 0
    %451 = vmatprep.subr.bf16.mxu0 0
    %452 = vmatpush1.bf16.msra.mxu0 0
    %453 = vmatprep.subr.bf16.mxu0 0
    %454 = vmatpush1.bf16.msra.mxu0 0
    %455 = vmatprep.subr.bf16.mxu0 0
    %456 = vmatpush1.bf16.msra.mxu0 0
    %457 = vmatprep.subr.bf16.mxu0 0
    %458 = vmatpush1.bf16.msra.mxu0 0
    %459 = vmatprep.subr.bf16.mxu0 0
    %460 = vmatpush1.bf16.msra.mxu0 0
    %461 = vmatprep.mubr.bf16.mxu0 0
    %462 = vmatmul.mubr.bf16.gmra.mrb[0].mxu0 0
    %v463 = vpop.f32.mrb[0].mxu0
    %v464 = vadd.f32 0.0, %v463
    %v465 = vpop.f32.mrb[0].mxu0
    %v466 = vadd.f32 0.0, %v465
    %v467 = vpop.f32.mrb[0].mxu0
    %v468 = vpop.f32.mrb[0].mxu0
    %469 = vdwg.mxu0
    %470 = vmatprep.subr.bf16.mxu0 %v368
    %471 = vmatpush1.bf16.msra.mxu0 %v367
    %472 = vmatprep.subr.bf16.mxu0 %v372
    %473 = vmatpush1.bf16.msra.mxu0 %v371
    %474 = vmatprep.subr.bf16.mxu0 %v376
    %475 = vmatpush1.bf16.msra.mxu0 %v375
    %476 = vmatprep.subr.bf16.mxu0 %v380
    %477 = vmatpush1.bf16.msra.mxu0 %v379
    %478 = vmatprep.subr.bf16.mxu0 %v384
    %479 = vmatpush1.bf16.msra.mxu0 %v383
    %480 = vmatprep.subr.bf16.mxu0 %v388
    %481 = vmatpush1.bf16.msra.mxu0 %v387
    %482 = vmatprep.subr.bf16.mxu0 %v392
    %483 = vmatpush1.bf16.msra.mxu0 %v391
    %484 = vmatprep.subr.bf16.mxu0 %v396
    %485 = vmatpush1.bf16.msra.mxu0 %v395
    %486 = vmatprep.subr.bf16.mxu0 0
    %487 = vmatpush1.bf16.msra.mxu0 0
    %488 = vmatprep.subr.bf16.mxu0 0
    %489 = vmatpush1.bf16.msra.mxu0 0
    %490 = vmatprep.subr.bf16.mxu0 0
    %491 = vmatpush1.bf16.msra.mxu0 0
    %492 = vmatprep.subr.bf16.mxu0 0
    %493 = vmatpush1.bf16.msra.mxu0 0
    %494 = vmatprep.subr.bf16.mxu0 0
    %495 = vmatpush1.bf16.msra.mxu0 0
    %496 = vmatprep.subr.bf16.mxu0 0
    %497 = vmatpush1.bf16.msra.mxu0 0
    %498 = vmatprep.subr.bf16.mxu0 0
    %499 = vmatpush1.bf16.msra.mxu0 0
    %500 = vmatprep.subr.bf16.mxu0 0
    %501 = vmatpush1.bf16.msra.mxu0 0
    %502 = vmatprep.mubr.bf16.mxu0 0
    %503 = vmatmul.mubr.bf16.gmra.mrb[0].mxu0 0
    %v504 = vpop.f32.mrb[0].mxu0
    %v505 = vadd.f32 0.0, %v504
    %v506 = vpop.f32.mrb[0].mxu0
    %v507 = vadd.f32 0.0, %v506
    %v508 = vpop.f32.mrb[0].mxu0
    %v509 = vpop.f32.mrb[0].mxu0
    %510 = vdwg.mxu0
    %v511 = vadd.f32 %v162, %v464
    %v512 = vadd.f32 %v164, %v466
    %v513 = vadd.f32 %v233, %v505
    %v514 = vadd.f32 %v235, %v507
    %v515 = vxor.u32 %v511, 2147483648
    %v516 = vxor.u32 %v512, 2147483648
    %v517 = vmul.f32 %v515, 1.442695
    %v518 = vpow.pop %v517
    %v519 = vmul.f32 %v516, 1.442695
    %v520 = vpow.pop %v519
    %v521 = vadd.f32 %v518, 1.0
    %v522 = vadd.f32 %v520, 1.0
    %v523 = vrcp.pop %v521
    %v524 = vmul.f32 1.0, %v523
    %v525 = vrcp.pop %v522
    %v526 = vmul.f32 1.0, %v525
    %v527 = vtanh.pop %v513
    %v528 = vxor.u32 %v514, 2147483648
    %v529 = vmul.f32 %v528, 1.442695
    %v530 = vpow.pop %v529
    %v531 = vadd.f32 %v530, 1.0
    %v532 = vrcp.pop %v531
    %v533 = vmul.f32 1.0, %v532
    %v534 = vmul.f32 %v526, 0.0
    %v535 = vmul.f32 %v524, %v527
    %v536 = vadd.f32 %v534, %v535
    %v537 = vtanh.pop %v536
    %v538 = vmul.f32 %v533, %v537
    %v539 = vpack.c.bf16 %v538, %v538
    %540 = vmatprep.subr.bf16.mxu0 %v366
    %541 = vmatpush1.bf16.msra.mxu0 %v365
    %542 = vmatprep.subr.bf16.mxu0 %v370
    %543 = vmatpush1.bf16.msra.mxu0 %v369
    %544 = vmatprep.subr.bf16.mxu0 %v374
    %545 = vmatpush1.bf16.msra.mxu0 %v373
    %546 = vmatprep.subr.bf16.mxu0 %v378
    %547 = vmatpush1.bf16.msra.mxu0 %v377
    %548 = vmatprep.subr.bf16.mxu0 %v382
    %549 = vmatpush1.bf16.msra.mxu0 %v381
    %550 = vmatprep.subr.bf16.mxu0 %v386
    %551 = vmatpush1.bf16.msra.mxu0 %v385
    %552 = vmatprep.subr.bf16.mxu0 %v390
    %553 = vmatpush1.bf16.msra.mxu0 %v389
    %554 = vmatprep.subr.bf16.mxu0 %v394
    %555 = vmatpush1.bf16.msra.mxu0 %v393
    %556 = vmatprep.subr.bf16.mxu0 0
    %557 = vmatpush1.bf16.msra.mxu0 0
    %558 = vmatprep.subr.bf16.mxu0 0
    %559 = vmatpush1.bf16.msra.mxu0 0
    %560 = vmatprep.subr.bf16.mxu0 0
    %561 = vmatpush1.bf16.msra.mxu0 0
    %562 = vmatprep.subr.bf16.mxu0 0
    %563 = vmatpush1.bf16.msra.mxu0 0
    %564 = vmatprep.subr.bf16.mxu0 0
    %565 = vmatpush1.bf16.msra.mxu0 0
    %566 = vmatprep.subr.bf16.mxu0 0
    %567 = vmatpush1.bf16.msra.mxu0 0
    %568 = vmatprep.subr.bf16.mxu0 0
    %569 = vmatpush1.bf16.msra.mxu0 0
    %570 = vmatprep.subr.bf16.mxu0 0
    %571 = vmatpush1.bf16.msra.mxu0 0
    %572 = vmatprep.mubr.bf16.mxu0 0
    %573 = vmatmul.mubr.bf16.gmra.mrb[0].mxu0 %v539
    %v574 = vpop.f32.mrb[0].mxu0
    %v575 = vadd.f32 0.0, %v574
    %v576 = vpop.f32.mrb[0].mxu0
    %v577 = vadd.f32 0.0, %v576
    %v578 = vpop.f32.mrb[0].mxu0
    %v579 = vpop.f32.mrb[0].mxu0
    %580 = vdwg.mxu0
    %581 = vmatprep.subr.bf16.mxu0 %v368
    %582 = vmatpush1.bf16.msra.mxu0 %v367
    %583 = vmatprep.subr.bf16.mxu0 %v372
    %584 = vmatpush1.bf16.msra.mxu0 %v371
    %585 = vmatprep.subr.bf16.mxu0 %v376
    %586 = vmatpush1.bf16.msra.mxu0 %v375
    %587 = vmatprep.subr.bf16.mxu0 %v380
    %588 = vmatpush1.bf16.msra.mxu0 %v379
    %589 = vmatprep.subr.bf16.mxu0 %v384
    %590 = vmatpush1.bf16.msra.mxu0 %v383
    %591 = vmatprep.subr.bf16.mxu0 %v388
    %592 = vmatpush1.bf16.msra.mxu0 %v387
    %593 = vmatprep.subr.bf16.mxu0 %v392
    %594 = vmatpush1.bf16.msra.mxu0 %v391
    %595 = vmatprep.subr.bf16.mxu0 %v396
    %596 = vmatpush1.bf16.msra.mxu0 %v395
    %597 = vmatprep.subr.bf16.mxu0 0
    %598 = vmatpush1.bf16.msra.mxu0 0
    %599 = vmatprep.subr.bf16.mxu0 0
    %600 = vmatpush1.bf16.msra.mxu0 0
    %601 = vmatprep.subr.bf16.mxu0 0
    %602 = vmatpush1.bf16.msra.mxu0 0
    %603 = vmatprep.subr.bf16.mxu0 0
    %604 = vmatpush1.bf16.msra.mxu0 0
    %605 = vmatprep.subr.bf16.mxu0 0
    %606 = vmatpush1.bf16.msra.mxu0 0
    %607 = vmatprep.subr.bf16.mxu0 0
    %608 = vmatpush1.bf16.msra.mxu0 0
    %609 = vmatprep.subr.bf16.mxu0 0
    %610 = vmatpush1.bf16.msra.mxu0 0
    %611 = vmatprep.subr.bf16.mxu0 0
    %612 = vmatpush1.bf16.msra.mxu0 0
    %613 = vmatprep.mubr.bf16.mxu0 0
    %614 = vmatmul.mubr.bf16.gmra.mrb[0].mxu0 %v539
    %v615 = vpop.f32.mrb[0].mxu0
    %v616 = vadd.f32 0.0, %v615
    %v617 = vpop.f32.mrb[0].mxu0
    %v618 = vadd.f32 0.0, %v617
    %v619 = vpop.f32.mrb[0].mxu0
    %v620 = vpop.f32.mrb[0].mxu0
    %621 = vdwg.mxu0
    %v626 = vrot.slane %v575, 7
    %v627 = vrot.slane %v577, 7
    %v628 = vrot.slane %v616, 7
    %v629 = vrot.slane %v618, 7
    %v634 = vadd.f32 %v162, %v626
    %v635 = vadd.f32 %v164, %v627
    %v636 = vadd.f32 %v233, %v628
    %v637 = vadd.f32 %v235, %v629
    %v638 = vxor.u32 %v634, 2147483648
    %v639 = vxor.u32 %v635, 2147483648
    %v640 = vmul.f32 %v638, 1.442695
    %v641 = vpow.pop %v640
    %v642 = vmul.f32 %v639, 1.442695
    %v643 = vpow.pop %v642
    %v644 = vadd.f32 %v641, 1.0
    %v645 = vadd.f32 %v643, 1.0
    %v646 = vrcp.pop %v644
    %v647 = vmul.f32 1.0, %v646
    %v648 = vrcp.pop %v645
    %v649 = vmul.f32 1.0, %v648
    %v650 = vtanh.pop %v636
    %v651 = vxor.u32 %v637, 2147483648
    %v652 = vmul.f32 %v651, 1.442695
    %v653 = vpow.pop %v652
    %v654 = vadd.f32 %v653, 1.0
    %v655 = vrcp.pop %v654
    %v656 = vmul.f32 1.0, %v655
    %v658 = vrot.slane %v536, 7
    %v660 = vmul.f32 %v649, %v658
    %v661 = vmul.f32 %v647, %v650
    %v662 = vadd.f32 %v660, %v661
    %v663 = vtanh.pop %v662
    %v664 = vmul.f32 %v656, %v663
    %v665 = vpack.c.bf16 %v664, %v664
    %v667 = vshrl.u32 %v665, 16
    %670 = vmatprep.subr.bf16.mxu0 %v366
    %671 = vmatpush1.bf16.msra.mxu0 %v365
    %672 = vmatprep.subr.bf16.mxu0 %v370
    %673 = vmatpush1.bf16.msra.mxu0 %v369
    %674 = vmatprep.subr.bf16.mxu0 %v374
    %675 = vmatpush1.bf16.msra.mxu0 %v373
    %676 = vmatprep.subr.bf16.mxu0 %v378
    %677 = vmatpush1.bf16.msra.mxu0 %v377
    %678 = vmatprep.subr.bf16.mxu0 %v382
    %679 = vmatpush1.bf16.msra.mxu0 %v381
    %680 = vmatprep.subr.bf16.mxu0 %v386
    %681 = vmatpush1.bf16.msra.mxu0 %v385
    %682 = vmatprep.subr.bf16.mxu0 %v390
    %683 = vmatpush1.bf16.msra.mxu0 %v389
    %684 = vmatprep.subr.bf16.mxu0 %v394
    %685 = vmatpush1.bf16.msra.mxu0 %v393
    %686 = vmatprep.subr.bf16.mxu0 0
    %687 = vmatpush1.bf16.msra.mxu0 0
    %688 = vmatprep.subr.bf16.mxu0 0
    %689 = vmatpush1.bf16.msra.mxu0 0
    %690 = vmatprep.subr.bf16.mxu0 0
    %691 = vmatpush1.bf16.msra.mxu0 0
    %692 = vmatprep.subr.bf16.mxu0 0
    %693 = vmatpush1.bf16.msra.mxu0 0
    %694 = vmatprep.subr.bf16.mxu0 0
    %695 = vmatpush1.bf16.msra.mxu0 0
    %696 = vmatprep.subr.bf16.mxu0 0
    %697 = vmatpush1.bf16.msra.mxu0 0
    %698 = vmatprep.subr.bf16.mxu0 0
    %699 = vmatpush1.bf16.msra.mxu0 0
    %700 = vmatprep.subr.bf16.mxu0 0
    %701 = vmatpush1.bf16.msra.mxu0 0
    %702 = vmatprep.mubr.bf16.mxu0 0
    %703 = vmatmul.mubr.bf16.gmra.mrb[0].mxu0 %v667
    %v704 = vpop.f32.mrb[0].mxu0
    %v705 = vadd.f32 0.0, %v704
    %v706 = vpop.f32.mrb[0].mxu0
    %v707 = vadd.f32 0.0, %v706
    %v708 = vpop.f32.mrb[0].mxu0
    %v709 = vpop.f32.mrb[0].mxu0
    %710 = vdwg.mxu0
    %711 = vmatprep.subr.bf16.mxu0 %v368
    %712 = vmatpush1.bf16.msra.mxu0 %v367
    %713 = vmatprep.subr.bf16.mxu0 %v372
    %714 = vmatpush1.bf16.msra.mxu0 %v371
    %715 = vmatprep.subr.bf16.mxu0 %v376
    %716 = vmatpush1.bf16.msra.mxu0 %v375
    %717 = vmatprep.subr.bf16.mxu0 %v380
    %718 = vmatpush1.bf16.msra.mxu0 %v379
    %719 = vmatprep.subr.bf16.mxu0 %v384
    %720 = vmatpush1.bf16.msra.mxu0 %v383
    %721 = vmatprep.subr.bf16.mxu0 %v388
    %722 = vmatpush1.bf16.msra.mxu0 %v387
    %723 = vmatprep.subr.bf16.mxu0 %v392
    %724 = vmatpush1.bf16.msra.mxu0 %v391
    %725 = vmatprep.subr.bf16.mxu0 %v396
    %726 = vmatpush1.bf16.msra.mxu0 %v395
    %727 = vmatprep.subr.bf16.mxu0 0
    %728 = vmatpush1.bf16.msra.mxu0 0
    %729 = vmatprep.subr.bf16.mxu0 0
    %730 = vmatpush1.bf16.msra.mxu0 0
    %731 = vmatprep.subr.bf16.mxu0 0
    %732 = vmatpush1.bf16.msra.mxu0 0
    %733 = vmatprep.subr.bf16.mxu0 0
    %734 = vmatpush1.bf16.msra.mxu0 0
    %735 = vmatprep.subr.bf16.mxu0 0
    %736 = vmatpush1.bf16.msra.mxu0 0
    %737 = vmatprep.subr.bf16.mxu0 0
    %738 = vmatpush1.bf16.msra.mxu0 0
    %739 = vmatprep.subr.bf16.mxu0 0
    %740 = vmatpush1.bf16.msra.mxu0 0
    %741 = vmatprep.subr.bf16.mxu0 0
    %742 = vmatpush1.bf16.msra.mxu0 0
    %743 = vmatprep.mubr.bf16.mxu0 0
    %744 = vmatmul.mubr.bf16.gmra.mrb[0].mxu0 %v667
    %v745 = vpop.f32.mrb[0].mxu0
    %v746 = vadd.f32 0.0, %v745
    %v747 = vpop.f32.mrb[0].mxu0
    %v748 = vadd.f32 0.0, %v747
    %v749 = vpop.f32.mrb[0].mxu0
    %v750 = vpop.f32.mrb[0].mxu0
    %751 = vdwg.mxu0
    %v756 = vrot.slane %v705, 6
    %v757 = vrot.slane %v707, 6
    %v758 = vrot.slane %v746, 6
    %v759 = vrot.slane %v748, 6
    %v764 = vadd.f32 %v162, %v756
    %v765 = vadd.f32 %v164, %v757
    %v766 = vadd.f32 %v233, %v758
    %v767 = vadd.f32 %v235, %v759
    %v768 = vxor.u32 %v764, 2147483648
    %v769 = vxor.u32 %v765, 2147483648
    %v770 = vmul.f32 %v768, 1.442695
    %v771 = vpow.pop %v770
    %v772 = vmul.f32 %v769, 1.442695
    %v773 = vpow.pop %v772
    %v774 = vadd.f32 %v771, 1.0
    %v775 = vadd.f32 %v773, 1.0
    %v776 = vrcp.pop %v774
    %v777 = vmul.f32 1.0, %v776
    %v778 = vrcp.pop %v775
    %v779 = vmul.f32 1.0, %v778
    %v780 = vtanh.pop %v766
    %v781 = vxor.u32 %v767, 2147483648
    %v782 = vmul.f32 %v781, 1.442695
    %v783 = vpow.pop %v782
    %v784 = vadd.f32 %v783, 1.0
    %v785 = vrcp.pop %v784
    %v786 = vmul.f32 1.0, %v785
    %v788 = vrot.slane %v662, 7
    %v790 = vmul.f32 %v779, %v788
    %v791 = vmul.f32 %v777, %v780
    %v792 = vadd.f32 %v790, %v791
    %v793 = vtanh.pop %v792
    %v794 = vmul.f32 %v786, %v793
    %v795 = vpack.c.bf16 %v794, %v794
    %v797 = vrot.slane %v795, 1
    %799 = vmatprep.subr.bf16.mxu0 %v366
    %800 = vmatpush1.bf16.msra.mxu0 %v365
    %801 = vmatprep.subr.bf16.mxu0 %v370
    %802 = vmatpush1.bf16.msra.mxu0 %v369
    %803 = vmatprep.subr.bf16.mxu0 %v374
    %804 = vmatpush1.bf16.msra.mxu0 %v373
    %805 = vmatprep.subr.bf16.mxu0 %v378
    %806 = vmatpush1.bf16.msra.mxu0 %v377
    %807 = vmatprep.subr.bf16.mxu0 %v382
    %808 = vmatpush1.bf16.msra.mxu0 %v381
    %809 = vmatprep.subr.bf16.mxu0 %v386
    %810 = vmatpush1.bf16.msra.mxu0 %v385
    %811 = vmatprep.subr.bf16.mxu0 %v390
    %812 = vmatpush1.bf16.msra.mxu0 %v389
    %813 = vmatprep.subr.bf16.mxu0 %v394
    %814 = vmatpush1.bf16.msra.mxu0 %v393
    %815 = vmatprep.subr.bf16.mxu0 0
    %816 = vmatpush1.bf16.msra.mxu0 0
    %817 = vmatprep.subr.bf16.mxu0 0
    %818 = vmatpush1.bf16.msra.mxu0 0
    %819 = vmatprep.subr.bf16.mxu0 0
    %820 = vmatpush1.bf16.msra.mxu0 0
    %821 = vmatprep.subr.bf16.mxu0 0
    %822 = vmatpush1.bf16.msra.mxu0 0
    %823 = vmatprep.subr.bf16.mxu0 0
    %824 = vmatpush1.bf16.msra.mxu0 0
    %825 = vmatprep.subr.bf16.mxu0 0
    %826 = vmatpush1.bf16.msra.mxu0 0
    %827 = vmatprep.subr.bf16.mxu0 0
    %828 = vmatpush1.bf16.msra.mxu0 0
    %829 = vmatprep.subr.bf16.mxu0 0
    %830 = vmatpush1.bf16.msra.mxu0 0
    %831 = vmatprep.mubr.bf16.mxu0 0
    %832 = vmatmul.mubr.bf16.gmra.mrb[0].mxu0 %v797
    %v833 = vpop.f32.mrb[0].mxu0
    %v834 = vadd.f32 0.0, %v833
    %v835 = vpop.f32.mrb[0].mxu0
    %v836 = vadd.f32 0.0, %v835
    %v837 = vpop.f32.mrb[0].mxu0
    %v838 = vpop.f32.mrb[0].mxu0
    %839 = vdwg.mxu0
    %840 = vmatprep.subr.bf16.mxu0 %v368
    %841 = vmatpush1.bf16.msra.mxu0 %v367
    %842 = vmatprep.subr.bf16.mxu0 %v372
    %843 = vmatpush1.bf16.msra.mxu0 %v371
    %844 = vmatprep.subr.bf16.mxu0 %v376
    %845 = vmatpush1.bf16.msra.mxu0 %v375
    %846 = vmatprep.subr.bf16.mxu0 %v380
    %847 = vmatpush1.bf16.msra.mxu0 %v379
    %848 = vmatprep.subr.bf16.mxu0 %v384
    %849 = vmatpush1.bf16.msra.mxu0 %v383
    %850 = vmatprep.subr.bf16.mxu0 %v388
    %851 = vmatpush1.bf16.msra.mxu0 %v387
    %852 = vmatprep.subr.bf16.mxu0 %v392
    %853 = vmatpush1.bf16.msra.mxu0 %v391
    %854 = vmatprep.subr.bf16.mxu0 %v396
    %855 = vmatpush1.bf16.msra.mxu0 %v395
    %856 = vmatprep.subr.bf16.mxu0 0
    %857 = vmatpush1.bf16.msra.mxu0 0
    %858 = vmatprep.subr.bf16.mxu0 0
    %859 = vmatpush1.bf16.msra.mxu0 0
    %860 = vmatprep.subr.bf16.mxu0 0
    %861 = vmatpush1.bf16.msra.mxu0 0
    %862 = vmatprep.subr.bf16.mxu0 0
    %863 = vmatpush1.bf16.msra.mxu0 0
    %864 = vmatprep.subr.bf16.mxu0 0
    %865 = vmatpush1.bf16.msra.mxu0 0
    %866 = vmatprep.subr.bf16.mxu0 0
    %867 = vmatpush1.bf16.msra.mxu0 0
    %868 = vmatprep.subr.bf16.mxu0 0
    %869 = vmatpush1.bf16.msra.mxu0 0
    %870 = vmatprep.subr.bf16.mxu0 0
    %871 = vmatpush1.bf16.msra.mxu0 0
    %872 = vmatprep.mubr.bf16.mxu0 0
    %873 = vmatmul.mubr.bf16.gmra.mrb[0].mxu0 %v797
    %v874 = vpop.f32.mrb[0].mxu0
    %v875 = vadd.f32 0.0, %v874
    %v876 = vpop.f32.mrb[0].mxu0
    %v877 = vadd.f32 0.0, %v876
    %v878 = vpop.f32.mrb[0].mxu0
    %v879 = vpop.f32.mrb[0].mxu0
    %880 = vdwg.mxu0
    %v885 = vrot.slane %v834, 5
    %v886 = vrot.slane %v836, 5
    %v887 = vrot.slane %v875, 5
    %v888 = vrot.slane %v877, 5
    %v893 = vadd.f32 %v162, %v885
    %v894 = vadd.f32 %v164, %v886
    %v895 = vadd.f32 %v233, %v887
    %v896 = vadd.f32 %v235, %v888
    %v897 = vxor.u32 %v893, 2147483648
    %v898 = vxor.u32 %v894, 2147483648
    %v899 = vmul.f32 %v897, 1.442695
    %v900 = vpow.pop %v899
    %v901 = vmul.f32 %v898, 1.442695
    %v902 = vpow.pop %v901
    %v903 = vadd.f32 %v900, 1.0
    %v904 = vadd.f32 %v902, 1.0
    %v905 = vrcp.pop %v903
    %v906 = vmul.f32 1.0, %v905
    %v907 = vrcp.pop %v904
    %v908 = vmul.f32 1.0, %v907
    %v909 = vtanh.pop %v895
    %v910 = vxor.u32 %v896, 2147483648
    %v911 = vmul.f32 %v910, 1.442695
    %v912 = vpow.pop %v911
    %v913 = vadd.f32 %v912, 1.0
    %v914 = vrcp.pop %v913
    %v915 = vmul.f32 1.0, %v914
    %v917 = vrot.slane %v792, 7
    %v919 = vmul.f32 %v908, %v917
    %v920 = vmul.f32 %v906, %v909
    %v921 = vadd.f32 %v919, %v920
    %v922 = vtanh.pop %v921
    %v923 = vmul.f32 %v915, %v922
    %v924 = vpack.c.bf16 %v923, %v923
    %v926 = vshrl.u32 %v924, 16
    %v928 = vrot.slane %v926, 1
    %930 = vmatprep.subr.bf16.mxu0 %v366
    %931 = vmatpush1.bf16.msra.mxu0 %v365
    %932 = vmatprep.subr.bf16.mxu0 %v370
    %933 = vmatpush1.bf16.msra.mxu0 %v369
    %934 = vmatprep.subr.bf16.mxu0 %v374
    %935 = vmatpush1.bf16.msra.mxu0 %v373
    %936 = vmatprep.subr.bf16.mxu0 %v378
    %937 = vmatpush1.bf16.msra.mxu0 %v377
    %938 = vmatprep.subr.bf16.mxu0 %v382
    %939 = vmatpush1.bf16.msra.mxu0 %v381
    %940 = vmatprep.subr.bf16.mxu0 %v386
    %941 = vmatpush1.bf16.msra.mxu0 %v385
    %942 = vmatprep.subr.bf16.mxu0 %v390
    %943 = vmatpush1.bf16.msra.mxu0 %v389
    %944 = vmatprep.subr.bf16.mxu0 %v394
    %945 = vmatpush1.bf16.msra.mxu0 %v393
    %946 = vmatprep.subr.bf16.mxu0 0
    %947 = vmatpush1.bf16.msra.mxu0 0
    %948 = vmatprep.subr.bf16.mxu0 0
    %949 = vmatpush1.bf16.msra.mxu0 0
    %950 = vmatprep.subr.bf16.mxu0 0
    %951 = vmatpush1.bf16.msra.mxu0 0
    %952 = vmatprep.subr.bf16.mxu0 0
    %953 = vmatpush1.bf16.msra.mxu0 0
    %954 = vmatprep.subr.bf16.mxu0 0
    %955 = vmatpush1.bf16.msra.mxu0 0
    %956 = vmatprep.subr.bf16.mxu0 0
    %957 = vmatpush1.bf16.msra.mxu0 0
    %958 = vmatprep.subr.bf16.mxu0 0
    %959 = vmatpush1.bf16.msra.mxu0 0
    %960 = vmatprep.subr.bf16.mxu0 0
    %961 = vmatpush1.bf16.msra.mxu0 0
    %962 = vmatprep.mubr.bf16.mxu0 0
    %963 = vmatmul.mubr.bf16.gmra.mrb[0].mxu0 %v928
    %v964 = vpop.f32.mrb[0].mxu0
    %v965 = vadd.f32 0.0, %v964
    %v966 = vpop.f32.mrb[0].mxu0
    %v967 = vadd.f32 0.0, %v966
    %v968 = vpop.f32.mrb[0].mxu0
    %v969 = vpop.f32.mrb[0].mxu0
    %970 = vdwg.mxu0
    %971 = vmatprep.subr.bf16.mxu0 %v368
    %972 = vmatpush1.bf16.msra.mxu0 %v367
    %973 = vmatprep.subr.bf16.mxu0 %v372
    %974 = vmatpush1.bf16.msra.mxu0 %v371
    %975 = vmatprep.subr.bf16.mxu0 %v376
    %976 = vmatpush1.bf16.msra.mxu0 %v375
    %977 = vmatprep.subr.bf16.mxu0 %v380
    %978 = vmatpush1.bf16.msra.mxu0 %v379
    %979 = vmatprep.subr.bf16.mxu0 %v384
    %980 = vmatpush1.bf16.msra.mxu0 %v383
    %981 = vmatprep.subr.bf16.mxu0 %v388
    %982 = vmatpush1.bf16.msra.mxu0 %v387
    %983 = vmatprep.subr.bf16.mxu0 %v392
    %984 = vmatpush1.bf16.msra.mxu0 %v391
    %985 = vmatprep.subr.bf16.mxu0 %v396
    %986 = vmatpush1.bf16.msra.mxu0 %v395
    %987 = vmatprep.subr.bf16.mxu0 0
    %988 = vmatpush1.bf16.msra.mxu0 0
    %989 = vmatprep.subr.bf16.mxu0 0
    %990 = vmatpush1.bf16.msra.mxu0 0
    %991 = vmatprep.subr.bf16.mxu0 0
    %992 = vmatpush1.bf16.msra.mxu0 0
    %993 = vmatprep.subr.bf16.mxu0 0
    %994 = vmatpush1.bf16.msra.mxu0 0
    %995 = vmatprep.subr.bf16.mxu0 0
    %996 = vmatpush1.bf16.msra.mxu0 0
    %997 = vmatprep.subr.bf16.mxu0 0
    %998 = vmatpush1.bf16.msra.mxu0 0
    %999 = vmatprep.subr.bf16.mxu0 0
    %1000 = vmatpush1.bf16.msra.mxu0 0
    %1001 = vmatprep.subr.bf16.mxu0 0
    %1002 = vmatpush1.bf16.msra.mxu0 0
    %1003 = vmatprep.mubr.bf16.mxu0 0
    %1004 = vmatmul.mubr.bf16.gmra.mrb[0].mxu0 %v928
    %v1005 = vpop.f32.mrb[0].mxu0
    %v1006 = vadd.f32 0.0, %v1005
    %v1007 = vpop.f32.mrb[0].mxu0
    %v1008 = vadd.f32 0.0, %v1007
    %v1009 = vpop.f32.mrb[0].mxu0
    %v1010 = vpop.f32.mrb[0].mxu0
    %1011 = vdwg.mxu0
    %v1016 = vrot.slane %v965, 4
    %v1017 = vrot.slane %v967, 4
    %v1018 = vrot.slane %v1006, 4
    %v1019 = vrot.slane %v1008, 4
    %v1024 = vadd.f32 %v162, %v1016
    %v1025 = vadd.f32 %v164, %v1017
    %v1026 = vadd.f32 %v233, %v1018
    %v1027 = vadd.f32 %v235, %v1019
    %v1028 = vxor.u32 %v1024, 2147483648
    %v1029 = vxor.u32 %v1025, 2147483648
    %v1030 = vmul.f32 %v1028, 1.442695
    %v1031 = vpow.pop %v1030
    %v1032 = vmul.f32 %v1029, 1.442695
    %v1033 = vpow.pop %v1032
    %v1034 = vadd.f32 %v1031, 1.0
    %v1035 = vadd.f32 %v1033, 1.0
    %v1036 = vrcp.pop %v1034
    %v1037 = vmul.f32 1.0, %v1036
    %v1038 = vrcp.pop %v1035
    %v1039 = vmul.f32 1.0, %v1038
    %v1040 = vtanh.pop %v1026
    %v1041 = vxor.u32 %v1027, 2147483648
    %v1042 = vmul.f32 %v1041, 1.442695
    %v1043 = vpow.pop %v1042
    %v1044 = vadd.f32 %v1043, 1.0
    %v1045 = vrcp.pop %v1044
    %v1046 = vmul.f32 1.0, %v1045
    %v1048 = vrot.slane %v921, 7
    %v1050 = vmul.f32 %v1039, %v1048
    %v1051 = vmul.f32 %v1037, %v1040
    %v1052 = vadd.f32 %v1050, %v1051
    %v1053 = vtanh.pop %v1052
    %v1054 = vmul.f32 %v1046, %v1053
    %v1055 = vpack.c.bf16 %v1054, %v1054
    %v1057 = vrot.slane %v1055, 2
    %1059 = vmatprep.subr.bf16.mxu0 %v366
    %1060 = vmatpush1.bf16.msra.mxu0 %v365
    %1061 = vmatprep.subr.bf16.mxu0 %v370
    %1062 = vmatpush1.bf16.msra.mxu0 %v369
    %1063 = vmatprep.subr.bf16.mxu0 %v374
    %1064 = vmatpush1.bf16.msra.mxu0 %v373
    %1065 = vmatprep.subr.bf16.mxu0 %v378
    %1066 = vmatpush1.bf16.msra.mxu0 %v377
    %1067 = vmatprep.subr.bf16.mxu0 %v382
    %1068 = vmatpush1.bf16.msra.mxu0 %v381
    %1069 = vmatprep.subr.bf16.mxu0 %v386
    %1070 = vmatpush1.bf16.msra.mxu0 %v385
    %1071 = vmatprep.subr.bf16.mxu0 %v390
    %1072 = vmatpush1.bf16.msra.mxu0 %v389
    %1073 = vmatprep.subr.bf16.mxu0 %v394
    %1074 = vmatpush1.bf16.msra.mxu0 %v393
    %1075 = vmatprep.subr.bf16.mxu0 0
    %1076 = vmatpush1.bf16.msra.mxu0 0
    %1077 = vmatprep.subr.bf16.mxu0 0
    %1078 = vmatpush1.bf16.msra.mxu0 0
    %1079 = vmatprep.subr.bf16.mxu0 0
    %1080 = vmatpush1.bf16.msra.mxu0 0
    %1081 = vmatprep.subr.bf16.mxu0 0
    %1082 = vmatpush1.bf16.msra.mxu0 0
    %1083 = vmatprep.subr.bf16.mxu0 0
    %1084 = vmatpush1.bf16.msra.mxu0 0
    %1085 = vmatprep.subr.bf16.mxu0 0
    %1086 = vmatpush1.bf16.msra.mxu0 0
    %1087 = vmatprep.subr.bf16.mxu0 0
    %1088 = vmatpush1.bf16.msra.mxu0 0
    %1089 = vmatprep.subr.bf16.mxu0 0
    %1090 = vmatpush1.bf16.msra.mxu0 0
    %1091 = vmatprep.mubr.bf16.mxu0 0
    %1092 = vmatmul.mubr.bf16.gmra.mrb[0].mxu0 %v1057
    %v1093 = vpop.f32.mrb[0].mxu0
    %v1094 = vadd.f32 0.0, %v1093
    %v1095 = vpop.f32.mrb[0].mxu0
    %v1096 = vadd.f32 0.0, %v1095
    %v1097 = vpop.f32.mrb[0].mxu0
    %v1098 = vpop.f32.mrb[0].mxu0
    %1099 = vdwg.mxu0
    %1100 = vmatprep.subr.bf16.mxu0 %v368
    %1101 = vmatpush1.bf16.msra.mxu0 %v367
    %1102 = vmatprep.subr.bf16.mxu0 %v372
    %1103 = vmatpush1.bf16.msra.mxu0 %v371
    %1104 = vmatprep.subr.bf16.mxu0 %v376
    %1105 = vmatpush1.bf16.msra.mxu0 %v375
    %1106 = vmatprep.subr.bf16.mxu0 %v380
    %1107 = vmatpush1.bf16.msra.mxu0 %v379
    %1108 = vmatprep.subr.bf16.mxu0 %v384
    %1109 = vmatpush1.bf16.msra.mxu0 %v383
    %1110 = vmatprep.subr.bf16.mxu0 %v388
    %1111 = vmatpush1.bf16.msra.mxu0 %v387
    %1112 = vmatprep.subr.bf16.mxu0 %v392
    %1113 = vmatpush1.bf16.msra.mxu0 %v391
    %1114 = vmatprep.subr.bf16.mxu0 %v396
    %1115 = vmatpush1.bf16.msra.mxu0 %v395
    %1116 = vmatprep.subr.bf16.mxu0 0
    %1117 = vmatpush1.bf16.msra.mxu0 0
    %1118 = vmatprep.subr.bf16.mxu0 0
    %1119 = vmatpush1.bf16.msra.mxu0 0
    %1120 = vmatprep.subr.bf16.mxu0 0
    %1121 = vmatpush1.bf16.msra.mxu0 0
    %1122 = vmatprep.subr.bf16.mxu0 0
    %1123 = vmatpush1.bf16.msra.mxu0 0
    %1124 = vmatprep.subr.bf16.mxu0 0
    %1125 = vmatpush1.bf16.msra.mxu0 0
    %1126 = vmatprep.subr.bf16.mxu0 0
    %1127 = vmatpush1.bf16.msra.mxu0 0
    %1128 = vmatprep.subr.bf16.mxu0 0
    %1129 = vmatpush1.bf16.msra.mxu0 0
    %1130 = vmatprep.subr.bf16.mxu0 0
    %1131 = vmatpush1.bf16.msra.mxu0 0
    %1132 = vmatprep.mubr.bf16.mxu0 0
    %1133 = vmatmul.mubr.bf16.gmra.mrb[0].mxu0 %v1057
    %v1134 = vpop.f32.mrb[0].mxu0
    %v1135 = vadd.f32 0.0, %v1134
    %v1136 = vpop.f32.mrb[0].mxu0
    %v1137 = vadd.f32 0.0, %v1136
    %v1138 = vpop.f32.mrb[0].mxu0
    %v1139 = vpop.f32.mrb[0].mxu0
    %1140 = vdwg.mxu0
    %v1145 = vrot.slane %v1094, 3
    %v1146 = vrot.slane %v1096, 3
    %v1147 = vrot.slane %v1135, 3
    %v1148 = vrot.slane %v1137, 3
    %v1153 = vadd.f32 %v162, %v1145
    %v1154 = vadd.f32 %v164, %v1146
    %v1155 = vadd.f32 %v233, %v1147
    %v1156 = vadd.f32 %v235, %v1148
    %v1157 = vxor.u32 %v1153, 2147483648
    %v1158 = vxor.u32 %v1154, 2147483648
    %v1159 = vmul.f32 %v1157, 1.442695
    %v1160 = vpow.pop %v1159
    %v1161 = vmul.f32 %v1158, 1.442695
    %v1162 = vpow.pop %v1161
    %v1163 = vadd.f32 %v1160, 1.0
    %v1164 = vadd.f32 %v1162, 1.0
    %v1165 = vrcp.pop %v1163
    %v1166 = vmul.f32 1.0, %v1165
    %v1167 = vrcp.pop %v1164
    %v1168 = vmul.f32 1.0, %v1167
    %v1169 = vtanh.pop %v1155
    %v1170 = vxor.u32 %v1156, 2147483648
    %v1171 = vmul.f32 %v1170, 1.442695
    %v1172 = vpow.pop %v1171
    %v1173 = vadd.f32 %v1172, 1.0
    %v1174 = vrcp.pop %v1173
    %v1175 = vmul.f32 1.0, %v1174
    %v1177 = vrot.slane %v1052, 7
    %v1179 = vmul.f32 %v1168, %v1177
    %v1180 = vmul.f32 %v1166, %v1169
    %v1181 = vadd.f32 %v1179, %v1180
    %v1182 = vtanh.pop %v1181
    %v1183 = vmul.f32 %v1175, %v1182
    %v1184 = vpack.c.bf16 %v1183, %v1183
    %v1186 = vshrl.u32 %v1184, 16
    %v1188 = vrot.slane %v1186, 2
    %1190 = vmatprep.subr.bf16.mxu0 %v366
    %1191 = vmatpush1.bf16.msra.mxu0 %v365
    %1192 = vmatprep.subr.bf16.mxu0 %v370
    %1193 = vmatpush1.bf16.msra.mxu0 %v369
    %1194 = vmatprep.subr.bf16.mxu0 %v374
    %1195 = vmatpush1.bf16.msra.mxu0 %v373
    %1196 = vmatprep.subr.bf16.mxu0 %v378
    %1197 = vmatpush1.bf16.msra.mxu0 %v377
    %1198 = vmatprep.subr.bf16.mxu0 %v382
    %1199 = vmatpush1.bf16.msra.mxu0 %v381
    %1200 = vmatprep.subr.bf16.mxu0 %v386
    %1201 = vmatpush1.bf16.msra.mxu0 %v385
    %1202 = vmatprep.subr.bf16.mxu0 %v390
    %1203 = vmatpush1.bf16.msra.mxu0 %v389
    %1204 = vmatprep.subr.bf16.mxu0 %v394
    %1205 = vmatpush1.bf16.msra.mxu0 %v393
    %1206 = vmatprep.subr.bf16.mxu0 0
    %1207 = vmatpush1.bf16.msra.mxu0 0
    %1208 = vmatprep.subr.bf16.mxu0 0
    %1209 = vmatpush1.bf16.msra.mxu0 0
    %1210 = vmatprep.subr.bf16.mxu0 0
    %1211 = vmatpush1.bf16.msra.mxu0 0
    %1212 = vmatprep.subr.bf16.mxu0 0
    %1213 = vmatpush1.bf16.msra.mxu0 0
    %1214 = vmatprep.subr.bf16.mxu0 0
    %1215 = vmatpush1.bf16.msra.mxu0 0
    %1216 = vmatprep.subr.bf16.mxu0 0
    %1217 = vmatpush1.bf16.msra.mxu0 0
    %1218 = vmatprep.subr.bf16.mxu0 0
    %1219 = vmatpush1.bf16.msra.mxu0 0
    %1220 = vmatprep.subr.bf16.mxu0 0
    %1221 = vmatpush1.bf16.msra.mxu0 0
    %1222 = vmatprep.mubr.bf16.mxu0 0
    %1223 = vmatmul.mubr.bf16.gmra.mrb[0].mxu0 %v1188
    %v1224 = vpop.f32.mrb[0].mxu0
    %v1225 = vadd.f32 0.0, %v1224
    %v1226 = vpop.f32.mrb[0].mxu0
    %v1227 = vadd.f32 0.0, %v1226
    %v1228 = vpop.f32.mrb[0].mxu0
    %v1229 = vpop.f32.mrb[0].mxu0
    %1230 = vdwg.mxu0
    %1231 = vmatprep.subr.bf16.mxu0 %v368
    %1232 = vmatpush1.bf16.msra.mxu0 %v367
    %1233 = vmatprep.subr.bf16.mxu0 %v372
    %1234 = vmatpush1.bf16.msra.mxu0 %v371
    %1235 = vmatprep.subr.bf16.mxu0 %v376
    %1236 = vmatpush1.bf16.msra.mxu0 %v375
    %1237 = vmatprep.subr.bf16.mxu0 %v380
    %1238 = vmatpush1.bf16.msra.mxu0 %v379
    %1239 = vmatprep.subr.bf16.mxu0 %v384
    %1240 = vmatpush1.bf16.msra.mxu0 %v383
    %1241 = vmatprep.subr.bf16.mxu0 %v388
    %1242 = vmatpush1.bf16.msra.mxu0 %v387
    %1243 = vmatprep.subr.bf16.mxu0 %v392
    %1244 = vmatpush1.bf16.msra.mxu0 %v391
    %1245 = vmatprep.subr.bf16.mxu0 %v396
    %1246 = vmatpush1.bf16.msra.mxu0 %v395
    %1247 = vmatprep.subr.bf16.mxu0 0
    %1248 = vmatpush1.bf16.msra.mxu0 0
    %1249 = vmatprep.subr.bf16.mxu0 0
    %1250 = vmatpush1.bf16.msra.mxu0 0
    %1251 = vmatprep.subr.bf16.mxu0 0
    %1252 = vmatpush1.bf16.msra.mxu0 0
    %1253 = vmatprep.subr.bf16.mxu0 0
    %1254 = vmatpush1.bf16.msra.mxu0 0
    %1255 = vmatprep.subr.bf16.mxu0 0
    %1256 = vmatpush1.bf16.msra.mxu0 0
    %1257 = vmatprep.subr.bf16.mxu0 0
    %1258 = vmatpush1.bf16.msra.mxu0 0
    %1259 = vmatprep.subr.bf16.mxu0 0
    %1260 = vmatpush1.bf16.msra.mxu0 0
    %1261 = vmatprep.subr.bf16.mxu0 0
    %1262 = vmatpush1.bf16.msra.mxu0 0
    %1263 = vmatprep.mubr.bf16.mxu0 0
    %1264 = vmatmul.mubr.bf16.gmra.mrb[0].mxu0 %v1188
    %v1265 = vpop.f32.mrb[0].mxu0
    %v1266 = vadd.f32 0.0, %v1265
    %v1267 = vpop.f32.mrb[0].mxu0
    %v1268 = vadd.f32 0.0, %v1267
    %v1269 = vpop.f32.mrb[0].mxu0
    %v1270 = vpop.f32.mrb[0].mxu0
    %1271 = vdwg.mxu0
    %v1276 = vrot.slane %v1225, 2
    %v1277 = vrot.slane %v1227, 2
    %v1278 = vrot.slane %v1266, 2
    %v1279 = vrot.slane %v1268, 2
    %v1284 = vadd.f32 %v162, %v1276
    %v1285 = vadd.f32 %v164, %v1277
    %v1286 = vadd.f32 %v233, %v1278
    %v1287 = vadd.f32 %v235, %v1279
    %v1288 = vxor.u32 %v1284, 2147483648
    %v1289 = vxor.u32 %v1285, 2147483648
    %v1290 = vmul.f32 %v1288, 1.442695
    %v1291 = vpow.pop %v1290
    %v1292 = vmul.f32 %v1289, 1.442695
    %v1293 = vpow.pop %v1292
    %v1294 = vadd.f32 %v1291, 1.0
    %v1295 = vadd.f32 %v1293, 1.0
    %v1296 = vrcp.pop %v1294
    %v1297 = vmul.f32 1.0, %v1296
    %v1298 = vrcp.pop %v1295
    %v1299 = vmul.f32 1.0, %v1298
    %v1300 = vtanh.pop %v1286
    %v1301 = vxor.u32 %v1287, 2147483648
    %v1302 = vmul.f32 %v1301, 1.442695
    %v1303 = vpow.pop %v1302
    %v1304 = vadd.f32 %v1303, 1.0
    %v1305 = vrcp.pop %v1304
    %v1306 = vmul.f32 1.0, %v1305
    %v1308 = vrot.slane %v1181, 7
    %v1310 = vmul.f32 %v1299, %v1308
    %v1311 = vmul.f32 %v1297, %v1300
    %v1312 = vadd.f32 %v1310, %v1311
    %v1313 = vtanh.pop %v1312
    %v1314 = vmul.f32 %v1306, %v1313
    %v1315 = vpack.c.bf16 %v1314, %v1314
    %v1317 = vrot.slane %v1315, 3
    %1319 = vmatprep.subr.bf16.mxu0 %v366
    %1320 = vmatpush1.bf16.msra.mxu0 %v365
    %1321 = vmatprep.subr.bf16.mxu0 %v370
    %1322 = vmatpush1.bf16.msra.mxu0 %v369
    %1323 = vmatprep.subr.bf16.mxu0 %v374
    %1324 = vmatpush1.bf16.msra.mxu0 %v373
    %1325 = vmatprep.subr.bf16.mxu0 %v378
    %1326 = vmatpush1.bf16.msra.mxu0 %v377
    %1327 = vmatprep.subr.bf16.mxu0 %v382
    %1328 = vmatpush1.bf16.msra.mxu0 %v381
    %1329 = vmatprep.subr.bf16.mxu0 %v386
    %1330 = vmatpush1.bf16.msra.mxu0 %v385
    %1331 = vmatprep.subr.bf16.mxu0 %v390
    %1332 = vmatpush1.bf16.msra.mxu0 %v389
    %1333 = vmatprep.subr.bf16.mxu0 %v394
    %1334 = vmatpush1.bf16.msra.mxu0 %v393
    %1335 = vmatprep.subr.bf16.mxu0 0
    %1336 = vmatpush1.bf16.msra.mxu0 0
    %1337 = vmatprep.subr.bf16.mxu0 0
    %1338 = vmatpush1.bf16.msra.mxu0 0
    %1339 = vmatprep.subr.bf16.mxu0 0
    %1340 = vmatpush1.bf16.msra.mxu0 0
    %1341 = vmatprep.subr.bf16.mxu0 0
    %1342 = vmatpush1.bf16.msra.mxu0 0
    %1343 = vmatprep.subr.bf16.mxu0 0
    %1344 = vmatpush1.bf16.msra.mxu0 0
    %1345 = vmatprep.subr.bf16.mxu0 0
    %1346 = vmatpush1.bf16.msra.mxu0 0
    %1347 = vmatprep.subr.bf16.mxu0 0
    %1348 = vmatpush1.bf16.msra.mxu0 0
    %1349 = vmatprep.subr.bf16.mxu0 0
    %1350 = vmatpush1.bf16.msra.mxu0 0
    %1351 = vmatprep.mubr.bf16.mxu0 0
    %1352 = vmatmul.mubr.bf16.gmra.mrb[0].mxu0 %v1317
    %v1353 = vpop.f32.mrb[0].mxu0
    %v1354 = vadd.f32 0.0, %v1353
    %v1355 = vpop.f32.mrb[0].mxu0
    %v1356 = vadd.f32 0.0, %v1355
    %v1357 = vpop.f32.mrb[0].mxu0
    %v1358 = vpop.f32.mrb[0].mxu0
    %1359 = vdwg.mxu0
    %1360 = vmatprep.subr.bf16.mxu0 %v368
    %1361 = vmatpush1.bf16.msra.mxu0 %v367
    %1362 = vmatprep.subr.bf16.mxu0 %v372
    %1363 = vmatpush1.bf16.msra.mxu0 %v371
    %1364 = vmatprep.subr.bf16.mxu0 %v376
    %1365 = vmatpush1.bf16.msra.mxu0 %v375
    %1366 = vmatprep.subr.bf16.mxu0 %v380
    %1367 = vmatpush1.bf16.msra.mxu0 %v379
    %1368 = vmatprep.subr.bf16.mxu0 %v384
    %1369 = vmatpush1.bf16.msra.mxu0 %v383
    %1370 = vmatprep.subr.bf16.mxu0 %v388
    %1371 = vmatpush1.bf16.msra.mxu0 %v387
    %1372 = vmatprep.subr.bf16.mxu0 %v392
    %1373 = vmatpush1.bf16.msra.mxu0 %v391
    %1374 = vmatprep.subr.bf16.mxu0 %v396
    %1375 = vmatpush1.bf16.msra.mxu0 %v395
    %1376 = vmatprep.subr.bf16.mxu0 0
    %1377 = vmatpush1.bf16.msra.mxu0 0
    %1378 = vmatprep.subr.bf16.mxu0 0
    %1379 = vmatpush1.bf16.msra.mxu0 0
    %1380 = vmatprep.subr.bf16.mxu0 0
    %1381 = vmatpush1.bf16.msra.mxu0 0
    %1382 = vmatprep.subr.bf16.mxu0 0
    %1383 = vmatpush1.bf16.msra.mxu0 0
    %1384 = vmatprep.subr.bf16.mxu0 0
    %1385 = vmatpush1.bf16.msra.mxu0 0
    %1386 = vmatprep.subr.bf16.mxu0 0
    %1387 = vmatpush1.bf16.msra.mxu0 0
    %1388 = vmatprep.subr.bf16.mxu0 0
    %1389 = vmatpush1.bf16.msra.mxu0 0
    %1390 = vmatprep.subr.bf16.mxu0 0
    %1391 = vmatpush1.bf16.msra.mxu0 0
    %1392 = vmatprep.mubr.bf16.mxu0 0
    %1393 = vmatmul.mubr.bf16.gmra.mrb[0].mxu0 %v1317
    %v1394 = vpop.f32.mrb[0].mxu0
    %v1395 = vadd.f32 0.0, %v1394
    %v1396 = vpop.f32.mrb[0].mxu0
    %v1397 = vadd.f32 0.0, %v1396
    %v1398 = vpop.f32.mrb[0].mxu0
    %v1399 = vpop.f32.mrb[0].mxu0
    %1400 = vdwg.mxu0
    %v1405 = vrot.slane %v1354, 1
    %v1406 = vrot.slane %v1356, 1
    %v1407 = vrot.slane %v1395, 1
    %v1408 = vrot.slane %v1397, 1
    %v1413 = vadd.f32 %v162, %v1405
    %v1414 = vadd.f32 %v164, %v1406
    %v1415 = vadd.f32 %v233, %v1407
    %v1416 = vadd.f32 %v235, %v1408
    %v1417 = vxor.u32 %v1413, 2147483648
    %v1418 = vxor.u32 %v1414, 2147483648
    %v1419 = vmul.f32 %v1417, 1.442695
    %v1420 = vpow.pop %v1419
    %v1421 = vmul.f32 %v1418, 1.442695
    %v1422 = vpow.pop %v1421
    %v1423 = vadd.f32 %v1420, 1.0
    %v1424 = vadd.f32 %v1422, 1.0
    %v1425 = vrcp.pop %v1423
    %v1426 = vmul.f32 1.0, %v1425
    %v1427 = vrcp.pop %v1424
    %v1428 = vmul.f32 1.0, %v1427
    %v1429 = vtanh.pop %v1415
    %v1430 = vxor.u32 %v1416, 2147483648
    %v1431 = vmul.f32 %v1430, 1.442695
    %v1432 = vpow.pop %v1431
    %v1433 = vadd.f32 %v1432, 1.0
    %v1434 = vrcp.pop %v1433
    %v1435 = vmul.f32 1.0, %v1434
    %v1437 = vrot.slane %v1312, 7
    %v1439 = vmul.f32 %v1428, %v1437
    %v1440 = vmul.f32 %v1426, %v1429
    %v1441 = vadd.f32 %v1439, %v1440
    %v1442 = vtanh.pop %v1441
    %v1443 = vmul.f32 %v1435, %v1442
    %v1444 = vld [vmem:[%s4] sm:$0x1]
    %v1446 = vlaneseq
    %v1447 = vshrl.u32 %v1446, 7
    %v1448 = vsub.s32 0, %v1447
    %v1449 = vrot.slane %v1444, %v1448
    %v1451 = vmul.f32 %v1443, %v1449
    %vm1452 = vcmask 1047559
    %v1453 = vsel %vm1452, %v1451, 0.0
    %1454 = vadd.xlane.f32.xlu0 %v1453
    %v1455 = vpop.xlane.xlu0 %1454
    %v1456 = vld [vmem:[#allocation2] sm:$0x1]
    %v1458 = vlaneseq
    %v1459 = vshrl.u32 %v1458, 7
    %v1460 = vsub.s32 0, %v1459
    %v1461 = vrot.slane %v1456, %v1460
    %v1463 = vadd.f32 %v1455, %v1461
    %vm1464 = vcmask 7175
    %1465 = vst.msk [vmem:[#allocation6 - $0x7] sm:$0x80] %vm1464, %v1463
    // Predicated region
    $region30: #{tpu_custom_call.1} parent=1 // pred_check
      _
    $region31: #{tpu_custom_call.1} parent=1 // pred_check_branch
      %1467 = sbr.rel (0) target = $region33
    $region32: #{tpu_custom_call.1} parent=1 // pred_region
      %s1469 = ssub.s32 16, 16
      %1470 = vsyncadd [#allocation5], %s1469
      %s1472 = sshll.u32 [#allocation6], 4
      %s1473 = int_to_ptr.vmem [resolvable:$true] %s1472
      %1475 = dma.vmem_to_hbm [thread:$0]  %s1473, 16, %s6, [#allocation5]
    $region33: #{tpu_custom_call.1} parent=1 // pred_fallthru
      _
    // Predicated region
    $region34: #{tpu_custom_call.1} parent=1 // pred_check
      _
    $region35: #{tpu_custom_call.1} parent=1 // pred_check_branch
      %1477 = sbr.rel (0) target = $region37
    $region36: #{tpu_custom_call.1} parent=1 // pred_region
      %1478 = dma.done [#allocation5], 16
    $region37: #{tpu_custom_call.1} parent=1 // pred_fallthru
      _
    %1479 = vsyncpa [#allocation4], 1
    %1480 = vsyncpa [#allocation5], 1

</llo_original>
